<compile_context>
chip_gen: v7x
topology: tpu7x:2x2x1
jax: 0.10.0
libtpu: 0.0.40
codegen_flags: <defaults>
</compile_context>

<pallas_src>
import functools
import math

import jax
import jax.numpy as jnp
from jax.experimental import pallas as pl
from jax.experimental.pallas import tpu as pltpu


def _conv_block_kernel(x_ref, w_ref, b_ref, o_ref, *, d_tile, H, KD, KH):
    """One (batch, D-tile) grid step.

    x_ref : (1, 1, d_tile+KD-1, Hp, Wp*Cin)  halo'd, padded, (W,C)-folded input (bf16)
    w_ref : (KD*KH, Wp*Cin, W*Cout)          banded (Toeplitz-along-W) weight   (bf16)
    b_ref : (1, W*Cout)                      bias tiled along W                 (f32)
    o_ref : (1, 1, d_tile*H, W*Cout)         lane-dense folded output           (f32)
    """
    xb = x_ref[0, 0]                                   # (TDp, Hp, WpC)
    wpc = xb.shape[-1]
    wcout = o_ref.shape[-1]

    acc = jnp.zeros((d_tile * H, wcout), jnp.float32)  # lane-dense f32 accumulator
    t = 0
    for kd in range(KD):                               # KD*KH taps, statically unrolled
        for kh in range(KH):
            # Static slice along sublane dims only; lane dim (Wp*Cin) stays intact.
            slab = xb[kd:kd + d_tile, kh:kh + H, :]    # (d_tile, H, WpC)
            slab = slab.reshape(d_tile * H, wpc)
            # K = Wp*Cin (deep), N = W*Cout (full 256 lanes), f32 accumulation on MXU.
            acc = acc + jnp.dot(slab, w_ref[t],
                                preferred_element_type=jnp.float32)
            t += 1

    acc = acc + b_ref[...]                             # (1, W*Cout) broadcast, f32
    o_ref[0, 0] = jnp.maximum(acc, 0.0).astype(o_ref.dtype)


def _banded_weight(weight, W, Wp):
    """(Cout, Cin, KD, KH, KW) -> (KD*KH, Wp*Cin, W*Cout), banded along W.

    band[kd*KH+kh, wp*Cin+ci, w*Cout+co] = weight[co, ci, kd, kh, wp-w]
    when 0 <= wp-w < KW, else 0.  One (Wp*Cin)-deep matmul per (kd, kh) tap then
    computes every kw shift and every output w at once with a lane-dense output.
    """
    Cout, Cin, KD, KH, KW = weight.shape
    w_t = jnp.transpose(weight, (2, 3, 4, 1, 0))                 # (KD, KH, KW, Cin, Cout)
    rel = jnp.arange(Wp)[:, None] - jnp.arange(W)[None, :]       # wp - w, (Wp, W)
    valid = (rel >= 0) & (rel < KW)
    band = w_t[:, :, jnp.clip(rel, 0, KW - 1)]                   # (KD, KH, Wp, W, Cin, Cout)
    band = jnp.where(valid[None, None, :, :, None, None], band, 0.0)
    band = jnp.transpose(band, (0, 1, 2, 4, 3, 5))               # (KD, KH, Wp, Cin, W, Cout)
    return band.reshape(KD * KH, Wp * Cin, W * Cout)


def _pick_d_tile(D, KD, Hp, WpC, H, WCout, in_itemsize, budget_bytes=8 << 20):
    """Largest divisor of D whose double-buffered in/out blocks fit the VMEM budget."""
    for td in range(D, 0, -1):
        if D % td:
            continue
        in_b = (td + KD - 1) * Hp * WpC * in_itemsize
        out_b = td * H * WCout * 4
        if 2 * (in_b + out_b) <= budget_bytes:
            return td
    return 1


def conv_block_forward(x_ncdhw, weight, bias, ksize, *, d_tile=None,
                       compute_dtype=jnp.bfloat16):
    """F.relu(Conv3d(x, weight, bias, stride=1, padding=k//2)) as a Pallas TPU kernel."""
    N, Cin, D, H, W = x_ncdhw.shape
    Cout, Cin_w, KD, KH, KW = weight.shape
    assert Cin == Cin_w and (KD, KH, KW) == tuple(ksize)
    if any(k % 2 == 0 for k in ksize):
        # padding=k//2 is only "same" for odd k; even k changes the output extent.
        raise NotImplementedError("ConvBlock Pallas kernel supports odd kernel sizes only")

    pd, ph, pw = KD // 2, KH // 2, KW // 2
    Dp, Hp, Wp = D + 2 * pd, H + 2 * ph, W + 2 * pw
    WpC, WCout = Wp * Cin, W * Cout

    if d_tile is None:
        d_tile = _pick_d_tile(D, KD, Hp, WpC, H, WCout,
                              jnp.dtype(compute_dtype).itemsize)
    assert D % d_tile == 0
    nT = D // d_tile
    TDp = d_tile + KD - 1

    # ---- plain-JAX layout plumbing (no compute): NCDHW -> padded NDHWC,
    #      (W, Cin) folded into lanes, halo'd D tiles, banded weight, tiled bias ----
    x = jnp.transpose(x_ncdhw, (0, 2, 3, 4, 1)).astype(compute_dtype)     # NDHWC, bf16
    xp = jnp.pad(x, ((0, 0), (pd, pd), (ph, ph), (pw, pw), (0, 0)))
    xp = xp.reshape(N, Dp, Hp, WpC)                                       # lane dim = Wp*Cin
    x_t = jnp.stack([xp[:, t * d_tile: t * d_tile + TDp] for t in range(nT)],
                    axis=1)                                               # (N, nT, TDp, Hp, WpC)

    w_band = _banded_weight(weight, W, Wp).astype(compute_dtype)          # (KD*KH, WpC, WCout)
    b_fold = jnp.tile(bias.astype(jnp.float32), W).reshape(1, WCout)      # (1, W*Cout)

    kernel = functools.partial(_conv_block_kernel, d_tile=d_tile, H=H, KD=KD, KH=KH)

    flops = 2 * N * D * H * W * Cout * Cin * KD * KH * KW
    bytes_accessed = (x_t.size * x_t.dtype.itemsize
                      + w_band.size * w_band.dtype.itemsize
                      + N * D * H * WCout * 4)

    out = pl.pallas_call(
        kernel,
        out_shape=jax.ShapeDtypeStruct((N, nT, d_tile * H, WCout), x_ncdhw.dtype),
        grid=(N, nT),
        in_specs=[
            pl.BlockSpec((1, 1, TDp, Hp, WpC), lambda n, t: (n, t, 0, 0, 0)),
            pl.BlockSpec((KD * KH, WpC, WCout), lambda n, t: (0, 0, 0)),
            pl.BlockSpec((1, WCout), lambda n, t: (0, 0)),
        ],
        out_specs=pl.BlockSpec((1, 1, d_tile * H, WCout), lambda n, t: (n, t, 0, 0)),
        compiler_params=pltpu.CompilerParams(
            dimension_semantics=("parallel", "parallel"),   # megacore / v7x 2-TC split
            vmem_limit_bytes=32 * 1024 * 1024,
        ),
        cost_estimate=pl.CostEstimate(flops=flops, transcendentals=0,
                                      bytes_accessed=bytes_accessed),
    )(x_t, w_band, b_fold)

    # (N, nT, d_tile*H, W*Cout) -> (N, D, H, W, Cout) -> NCDHW
    out = out.reshape(N, nT, d_tile, H, W, Cout).reshape(N, D, H, W, Cout)
    return jnp.transpose(out, (0, 4, 1, 2, 3))


def _reference_forward(x_ncdhw, weight, bias, ksize):
    """Pure-JAX reference (lax conv) for correctness checking."""
    pd, ph, pw = (k // 2 for k in ksize)
    y = jax.lax.conv_general_dilated(
        x_ncdhw, weight,
        window_strides=(1, 1, 1),
        padding=[(pd, pd), (ph, ph), (pw, pw)],
        dimension_numbers=("NCDHW", "OIDHW", "NCDHW"),
        preferred_element_type=jnp.float32,
    )
    y = y + bias[None, :, None, None, None]
    return jnp.maximum(y, 0.0)


if __name__ == "__main__":
    ksize = (3, 3, 3)
    N, Cin, Cout = 2, 32, 32          # Conv3d(32, 32, ...) per the module
    D, H, W = 4, 8, 8

    key = jax.random.PRNGKey(0)
    kx, kwt, kb = jax.random.split(key, 3)

    fan_in = Cin * ksize[0] * ksize[1] * ksize[2]
    bound = 1.0 / math.sqrt(fan_in)
    weight = jax.random.uniform(kwt, (Cout, Cin) + ksize, jnp.float32,
                                minval=-bound, maxval=bound)
    bias = jax.random.uniform(kb, (Cout,), jnp.float32, minval=-bound, maxval=bound)
    x = jax.random.normal(kx, (N, Cin, D, H, W), jnp.float32)

    # Reference with operands rounded to bf16 (the kernel feeds bf16 to the MXU but
    # accumulates, adds bias and applies ReLU in f32), so the comparison isolates
    # kernel correctness from the agreed operand quantization.
    xq = x.astype(jnp.bfloat16).astype(jnp.float32)
    wq = weight.astype(jnp.bfloat16).astype(jnp.float32)
    ref = jax.block_until_ready(_reference_forward(xq, wq, bias, ksize))

    out = jax.block_until_ready(conv_block_forward(x, weight, bias, ksize, d_tile=2))
    assert out.shape == ref.shape == (N, Cout, D, H, W)
    assert jnp.allclose(out, ref, atol=1e-3, rtol=1e-3), "mismatch vs reference (d_tile=2)"

    out_auto = jax.block_until_ready(conv_block_forward(x, weight, bias, ksize))
    assert jnp.allclose(out_auto, ref, atol=1e-3, rtol=1e-3), "mismatch vs reference (auto tile)"

    print("KERNEL_OK")
</pallas_src>

<mosaic_0001>
module attributes {stable_mosaic.version = 11 : i64} {
  func.func @_conv_block_kernel(%arg0: i32, %arg1: i32, %arg2: memref<1x1x4x10x320xbf16, #tpu.memory_space<vmem>>, %arg3: memref<9x320x256xbf16, #tpu.memory_space<vmem>>, %arg4: memref<1x256xf32, #tpu.memory_space<vmem>>, %arg5: memref<1x1x16x256xf32, #tpu.memory_space<vmem>>) attributes {dimension_semantics = [#tpu.dimension_semantics<parallel>, #tpu.dimension_semantics<parallel>], iteration_bounds = array<i64: 2, 2>, scalar_prefetch = 0 : i64, scratch_operands = 0 : i64, tpu.core_type = #tpu.core_type<tc>, window_params = [{transform_indices = @transform_0, window_bounds = array<i64: 1, 1, 4, 10, 320>}, {pipeline_mode = #tpu.pipeline_mode<synchronous>, transform_indices = @transform_1, window_bounds = array<i64: 9, 320, 256>}, {pipeline_mode = #tpu.pipeline_mode<synchronous>, transform_indices = @transform_2, window_bounds = array<i64: 1, 256>}, {transform_indices = @transform_3, window_bounds = array<i64: 1, 1, 16, 256>}]} {
    %c0 = arith.constant 0 : index
    %c0_0 = arith.constant 0 : index
    %c0_1 = arith.constant 0 : index
    %c0_2 = arith.constant 0 : index
    %c0_3 = arith.constant 0 : index
    %0 = vector.load %arg2[%c0, %c0_0, %c0_1, %c0_2, %c0_3] : memref<1x1x4x10x320xbf16, #tpu.memory_space<vmem>>, vector<1x1x4x10x320xbf16>
    %1 = vector.shape_cast %0 : vector<1x1x4x10x320xbf16> to vector<4x10x320xbf16>
    %cst = arith.constant 0.000000e+00 : f32
    %2 = vector.broadcast %cst : f32 to vector<16x256xf32>
    %3 = vector.extract_strided_slice %1 {offsets = [0, 0, 0], sizes = [2, 8, 320], strides = [1, 1, 1]} : vector<4x10x320xbf16> to vector<2x8x320xbf16>
    %4 = vector.shape_cast %3 : vector<2x8x320xbf16> to vector<16x320xbf16>
    %c0_4 = arith.constant 0 : index
    %c0_5 = arith.constant 0 : index
    %c0_6 = arith.constant 0 : index
    %5 = vector.load %arg3[%c0_4, %c0_5, %c0_6] : memref<9x320x256xbf16, #tpu.memory_space<vmem>>, vector<1x320x256xbf16>
    %6 = vector.shape_cast %5 : vector<1x320x256xbf16> to vector<320x256xbf16>
    %cst_7 = arith.constant dense<0.000000e+00> : vector<16x256xf32>
    %7 = tpu.matmul %4, %6, %cst_7 {dimension_numbers = #tpu.dot_dimension_numbers<[1], [0], [0], [1], [0, 0, 1, 1], [], []>} : vector<16x320xbf16>, vector<320x256xbf16>, vector<16x256xf32> -> vector<16x256xf32>
    %8 = arith.addf %2, %7 : vector<16x256xf32>
    %9 = vector.extract_strided_slice %1 {offsets = [0, 1, 0], sizes = [2, 8, 320], strides = [1, 1, 1]} : vector<4x10x320xbf16> to vector<2x8x320xbf16>
    %10 = vector.shape_cast %9 : vector<2x8x320xbf16> to vector<16x320xbf16>
    %c1 = arith.constant 1 : index
    %c0_8 = arith.constant 0 : index
    %c0_9 = arith.constant 0 : index
    %11 = vector.load %arg3[%c1, %c0_8, %c0_9] : memref<9x320x256xbf16, #tpu.memory_space<vmem>>, vector<1x320x256xbf16>
    %12 = vector.shape_cast %11 : vector<1x320x256xbf16> to vector<320x256xbf16>
    %cst_10 = arith.constant dense<0.000000e+00> : vector<16x256xf32>
    %13 = tpu.matmul %10, %12, %cst_10 {dimension_numbers = #tpu.dot_dimension_numbers<[1], [0], [0], [1], [0, 0, 1, 1], [], []>} : vector<16x320xbf16>, vector<320x256xbf16>, vector<16x256xf32> -> vector<16x256xf32>
    %14 = arith.addf %8, %13 : vector<16x256xf32>
    %15 = vector.extract_strided_slice %1 {offsets = [0, 2, 0], sizes = [2, 8, 320], strides = [1, 1, 1]} : vector<4x10x320xbf16> to vector<2x8x320xbf16>
    %16 = vector.shape_cast %15 : vector<2x8x320xbf16> to vector<16x320xbf16>
    %c2 = arith.constant 2 : index
    %c0_11 = arith.constant 0 : index
    %c0_12 = arith.constant 0 : index
    %17 = vector.load %arg3[%c2, %c0_11, %c0_12] : memref<9x320x256xbf16, #tpu.memory_space<vmem>>, vector<1x320x256xbf16>
    %18 = vector.shape_cast %17 : vector<1x320x256xbf16> to vector<320x256xbf16>
    %cst_13 = arith.constant dense<0.000000e+00> : vector<16x256xf32>
    %19 = tpu.matmul %16, %18, %cst_13 {dimension_numbers = #tpu.dot_dimension_numbers<[1], [0], [0], [1], [0, 0, 1, 1], [], []>} : vector<16x320xbf16>, vector<320x256xbf16>, vector<16x256xf32> -> vector<16x256xf32>
    %20 = arith.addf %14, %19 : vector<16x256xf32>
    %21 = vector.extract_strided_slice %1 {offsets = [1, 0, 0], sizes = [2, 8, 320], strides = [1, 1, 1]} : vector<4x10x320xbf16> to vector<2x8x320xbf16>
    %22 = vector.shape_cast %21 : vector<2x8x320xbf16> to vector<16x320xbf16>
    %c3 = arith.constant 3 : index
    %c0_14 = arith.constant 0 : index
    %c0_15 = arith.constant 0 : index
    %23 = vector.load %arg3[%c3, %c0_14, %c0_15] : memref<9x320x256xbf16, #tpu.memory_space<vmem>>, vector<1x320x256xbf16>
    %24 = vector.shape_cast %23 : vector<1x320x256xbf16> to vector<320x256xbf16>
    %cst_16 = arith.constant dense<0.000000e+00> : vector<16x256xf32>
    %25 = tpu.matmul %22, %24, %cst_16 {dimension_numbers = #tpu.dot_dimension_numbers<[1], [0], [0], [1], [0, 0, 1, 1], [], []>} : vector<16x320xbf16>, vector<320x256xbf16>, vector<16x256xf32> -> vector<16x256xf32>
    %26 = arith.addf %20, %25 : vector<16x256xf32>
    %27 = vector.extract_strided_slice %1 {offsets = [1, 1, 0], sizes = [2, 8, 320], strides = [1, 1, 1]} : vector<4x10x320xbf16> to vector<2x8x320xbf16>
    %28 = vector.shape_cast %27 : vector<2x8x320xbf16> to vector<16x320xbf16>
    %c4 = arith.constant 4 : index
    %c0_17 = arith.constant 0 : index
    %c0_18 = arith.constant 0 : index
    %29 = vector.load %arg3[%c4, %c0_17, %c0_18] : memref<9x320x256xbf16, #tpu.memory_space<vmem>>, vector<1x320x256xbf16>
    %30 = vector.shape_cast %29 : vector<1x320x256xbf16> to vector<320x256xbf16>
    %cst_19 = arith.constant dense<0.000000e+00> : vector<16x256xf32>
    %31 = tpu.matmul %28, %30, %cst_19 {dimension_numbers = #tpu.dot_dimension_numbers<[1], [0], [0], [1], [0, 0, 1, 1], [], []>} : vector<16x320xbf16>, vector<320x256xbf16>, vector<16x256xf32> -> vector<16x256xf32>
    %32 = arith.addf %26, %31 : vector<16x256xf32>
    %33 = vector.extract_strided_slice %1 {offsets = [1, 2, 0], sizes = [2, 8, 320], strides = [1, 1, 1]} : vector<4x10x320xbf16> to vector<2x8x320xbf16>
    %34 = vector.shape_cast %33 : vector<2x8x320xbf16> to vector<16x320xbf16>
    %c5 = arith.constant 5 : index
    %c0_20 = arith.constant 0 : index
    %c0_21 = arith.constant 0 : index
    %35 = vector.load %arg3[%c5, %c0_20, %c0_21] : memref<9x320x256xbf16, #tpu.memory_space<vmem>>, vector<1x320x256xbf16>
    %36 = vector.shape_cast %35 : vector<1x320x256xbf16> to vector<320x256xbf16>
    %cst_22 = arith.constant dense<0.000000e+00> : vector<16x256xf32>
    %37 = tpu.matmul %34, %36, %cst_22 {dimension_numbers = #tpu.dot_dimension_numbers<[1], [0], [0], [1], [0, 0, 1, 1], [], []>} : vector<16x320xbf16>, vector<320x256xbf16>, vector<16x256xf32> -> vector<16x256xf32>
    %38 = arith.addf %32, %37 : vector<16x256xf32>
    %39 = vector.extract_strided_slice %1 {offsets = [2, 0, 0], sizes = [2, 8, 320], strides = [1, 1, 1]} : vector<4x10x320xbf16> to vector<2x8x320xbf16>
    %40 = vector.shape_cast %39 : vector<2x8x320xbf16> to vector<16x320xbf16>
    %c6 = arith.constant 6 : index
    %c0_23 = arith.constant 0 : index
    %c0_24 = arith.constant 0 : index
    %41 = vector.load %arg3[%c6, %c0_23, %c0_24] : memref<9x320x256xbf16, #tpu.memory_space<vmem>>, vector<1x320x256xbf16>
    %42 = vector.shape_cast %41 : vector<1x320x256xbf16> to vector<320x256xbf16>
    %cst_25 = arith.constant dense<0.000000e+00> : vector<16x256xf32>
    %43 = tpu.matmul %40, %42, %cst_25 {dimension_numbers = #tpu.dot_dimension_numbers<[1], [0], [0], [1], [0, 0, 1, 1], [], []>} : vector<16x320xbf16>, vector<320x256xbf16>, vector<16x256xf32> -> vector<16x256xf32>
    %44 = arith.addf %38, %43 : vector<16x256xf32>
    %45 = vector.extract_strided_slice %1 {offsets = [2, 1, 0], sizes = [2, 8, 320], strides = [1, 1, 1]} : vector<4x10x320xbf16> to vector<2x8x320xbf16>
    %46 = vector.shape_cast %45 : vector<2x8x320xbf16> to vector<16x320xbf16>
    %c7 = arith.constant 7 : index
    %c0_26 = arith.constant 0 : index
    %c0_27 = arith.constant 0 : index
    %47 = vector.load %arg3[%c7, %c0_26, %c0_27] : memref<9x320x256xbf16, #tpu.memory_space<vmem>>, vector<1x320x256xbf16>
    %48 = vector.shape_cast %47 : vector<1x320x256xbf16> to vector<320x256xbf16>
    %cst_28 = arith.constant dense<0.000000e+00> : vector<16x256xf32>
    %49 = tpu.matmul %46, %48, %cst_28 {dimension_numbers = #tpu.dot_dimension_numbers<[1], [0], [0], [1], [0, 0, 1, 1], [], []>} : vector<16x320xbf16>, vector<320x256xbf16>, vector<16x256xf32> -> vector<16x256xf32>
    %50 = arith.addf %44, %49 : vector<16x256xf32>
    %51 = vector.extract_strided_slice %1 {offsets = [2, 2, 0], sizes = [2, 8, 320], strides = [1, 1, 1]} : vector<4x10x320xbf16> to vector<2x8x320xbf16>
    %52 = vector.shape_cast %51 : vector<2x8x320xbf16> to vector<16x320xbf16>
    %c8 = arith.constant 8 : index
    %c0_29 = arith.constant 0 : index
    %c0_30 = arith.constant 0 : index
    %53 = vector.load %arg3[%c8, %c0_29, %c0_30] : memref<9x320x256xbf16, #tpu.memory_space<vmem>>, vector<1x320x256xbf16>
    %54 = vector.shape_cast %53 : vector<1x320x256xbf16> to vector<320x256xbf16>
    %cst_31 = arith.constant dense<0.000000e+00> : vector<16x256xf32>
    %55 = tpu.matmul %52, %54, %cst_31 {dimension_numbers = #tpu.dot_dimension_numbers<[1], [0], [0], [1], [0, 0, 1, 1], [], []>} : vector<16x320xbf16>, vector<320x256xbf16>, vector<16x256xf32> -> vector<16x256xf32>
    %56 = arith.addf %50, %55 : vector<16x256xf32>
    %c0_32 = arith.constant 0 : index
    %c0_33 = arith.constant 0 : index
    %57 = vector.load %arg4[%c0_32, %c0_33] : memref<1x256xf32, #tpu.memory_space<vmem>>, vector<1x256xf32>
    %58 = vector.broadcast %57 : vector<1x256xf32> to vector<16x256xf32>
    %59 = arith.addf %56, %58 : vector<16x256xf32>
    %cst_34 = arith.constant 0.000000e+00 : f32
    %60 = vector.broadcast %cst_34 : f32 to vector<16x256xf32>
    %61 = arith.maximumf %59, %60 : vector<16x256xf32>
    %c0_35 = arith.constant 0 : index
    %c0_36 = arith.constant 0 : index
    %c0_37 = arith.constant 0 : index
    %c0_38 = arith.constant 0 : index
    %62 = vector.load %arg5[%c0_35, %c0_36, %c0_37, %c0_38] : memref<1x1x16x256xf32, #tpu.memory_space<vmem>>, vector<1x1x16x256xf32>
    %63 = vector.shape_cast %62 : vector<1x1x16x256xf32> to vector<16x256xf32>
    %64 = vector.shape_cast %61 : vector<16x256xf32> to vector<1x1x16x256xf32>
    tpu.vector_store %arg5[%c0_35, %c0_36, %c0_37, %c0_38], %64 {strides = array<i32>} : memref<1x1x16x256xf32, #tpu.memory_space<vmem>>, vector<1x1x16x256xf32>,
    return
  }
  func.func @transform_0(%arg0: i32, %arg1: i32) -> (i32, i32, i32, i32, i32) {
    %c0_i32 = arith.constant 0 : i32
    %c0_i32_0 = arith.constant 0 : i32
    %c0_i32_1 = arith.constant 0 : i32
    %c0_i32_2 = arith.constant 0 : i32
    return %arg0, %arg1, %c0_i32, %c0_i32_0, %c0_i32_1 : i32, i32, i32, i32, i32
  }
  func.func @transform_1(%arg0: i32, %arg1: i32) -> (i32, i32, i32) {
    %c0_i32 = arith.constant 0 : i32
    %c0_i32_0 = arith.constant 0 : i32
    %c0_i32_1 = arith.constant 0 : i32
    %c0_i32_2 = arith.constant 0 : i32
    return %c0_i32, %c0_i32_0, %c0_i32_1 : i32, i32, i32
  }
  func.func @transform_2(%arg0: i32, %arg1: i32) -> (i32, i32) {
    %c0_i32 = arith.constant 0 : i32
    %c0_i32_0 = arith.constant 0 : i32
    %c0_i32_1 = arith.constant 0 : i32
    return %c0_i32, %c0_i32_0 : i32, i32
  }
  func.func @transform_3(%arg0: i32, %arg1: i32) -> (i32, i32, i32, i32) {
    %c0_i32 = arith.constant 0 : i32
    %c0_i32_0 = arith.constant 0 : i32
    %c0_i32_1 = arith.constant 0 : i32
    return %arg0, %arg1, %c0_i32, %c0_i32_0 : i32, i32, i32, i32
  }
}

</mosaic_0001>

<llo_original>
// kernel: tpu_custom_call.1
$region0: #{tpu_custom_call.1}
  #allocation0 [shape = 'u32[]', space=smem, size = 0x4, offset = 0x4, fixed_abs, tag = 'smem constant byte address 0x4 - core index']
  #allocation1 [shape = 'u32[144,128]{1,0:T(1,128)}', space=vmem, size = 0x12000, scoped, tag = 'internal scratch']
  %s0 = inlined_call_operand.vmem [shape: bf16[2,2,4,10,320], index: 0, kind: input, shape index: {}]
  %s1 = inlined_call_operand.hbm [shape: bf16[9,320,256], index: 1, kind: input, shape index: {}]
  %s2 = inlined_call_operand.hbm [shape: f32[1,256], index: 2, kind: input, shape index: {}]
  %s3 = inlined_call_operand.hbm [shape: f32[2,2,16,256], index: 3, kind: output, shape index: {}]
  %s4 = sld [smem:[#allocation0]]
  $region53: #{tpu_custom_call.1} parent=0
    _
  %s6 = ssub.s32 1, %s4
  %s7 = scalar_select 0, %s6, %s4
  $region1: #{tpu_custom_call.1} parent=0
    #allocation2 [shape = 'u8[1474560]{0}', space=vmem, size = 0x168000, scoped, tag = 'input window, operand 1, single buffered']
    #allocation3 [shape = 's32[2]{0}', space=sflag, size = 0x8, scoped, tag = 'scoped memory for tpu_custom_call.1']
    #allocation4 [shape = 's32[2]{0}', space=sflag, size = 0x8, scoped, tag = 'scoped memory for tpu_custom_call.1']
    #allocation5 [shape = 'u8[1024]{0}', space=vmem, size = 0x400, scoped, tag = 'input window, operand 2, single buffered']
    #allocation6 [shape = 's32[1]{0}', space=sflag, size = 0x4, scoped, tag = 'scoped memory for tpu_custom_call.1']
    #allocation7 [shape = 'u8[32768]{0}', space=vmem, size = 0x8000, scoped, tag = 'output window, operand 0']
    %8 = vsyncpa [#allocation3], 0
    %9 = vsyncpa [#allocation6], 0
    %10 = vsyncpa [#allocation4], 0
    %s11 = scalar_lea.sflag [#allocation4], 1
    %12 = vsyncpa %s11, 0
    loop: start=0, step=1, limit=6
    $region2: #{tpu_custom_call.1} parent=1 // loop_pre_header
      _
    $region3: #{tpu_custom_call.1} parent=1 // loop_header
      %s14 = sphi 0, %s18
      %p15 = scmp.ge.s32.totalorder %s14, 6
      %s21 = sphi 0, %s33
      %s22 = sphi 0, %s29
      %s23 = sphi 0, %s21
      %s24 = sphi 0, %s22
      %s25 = sphi 0, %s23
      %s26 = sphi 0, %s24
      %s38 = sphi 0, %s40
      %s41 = sphi 0, %s38
      %s42 = sphi 0, %s41
      %s58 = sphi 0, %s42
      %s62 = sphi 0, %s62
      %s64 = sphi 0, %s62
      %s65 = sphi 0, %s64
      %s79 = sphi 0, %s65
      %s83 = sphi 0, %s83
      %s85 = sphi 0, %s83
      %s86 = sphi 0, %s85
      %s100 = sphi 0, %s86
      %s108 = sphi 0, %s110
      %s111 = sphi 0, %s108
      %s112 = sphi 0, %s111
      %s128 = sphi 0, %s112
    $region4: #{tpu_custom_call.1} parent=1 // loop_header_branch
      %17 = sbr.rel (%p15) target = $region8
    $region5: #{tpu_custom_call.1} parent=1 // loop_body
      %s19 = ssub.s32 %s14, 1
      %s20 = ssub.s32 %s14, 2
      %s27 = sadd.s32 1, %s22
      %p28 = scmp.ge.s32.totalorder %s27, 2
      %s29 = scalar_select %p28, 0, %s27
      %s30 = sadd.s32 1, %s21
      %s31 = scalar_select %p28, %s30, %s21
      %p32 = scmp.ge.s32.totalorder %s31, 2
      %s33 = scalar_select %p32, 0, %s31
      %s34 = ssub.s32 %s21, %s33
      %s35 = ssub.s32 %s22, %s29
      %s36 = sor.u32 %s34, %s35
      %p37 = scmp.eq.s32.totalorder %s36, 0
      %s39 = sadd.s32 %s38, 1
      %s40 = scalar_select %p37, %s38, %s39
      %p43 = pneg %p37
      %p44 = scmp.eq.s32.totalorder %s14, 3
      %p45 = por %p43, %p44
      %p46 = scmp.ne.s32.totalorder %s38, %s41
      %p47 = scmp.eq.s32.totalorder %s14, 0
      %p48 = por %p46, %p47
      %p49 = scmp.ne.s32.totalorder %s38, %s41
      %p50 = scmp.eq.s32.totalorder %s19, 3
      %p51 = por %p49, %p50
      %p52 = scmp.ne.s32.totalorder %s41, %s42
      %p53 = scmp.eq.s32.totalorder %s19, 0
      %p54 = por %p52, %p53
      %p55 = scmp.ne.s32.totalorder %s41, %s42
      %p56 = scmp.eq.s32.totalorder %s20, 3
      %p57 = por %p55, %p56
      %p59 = scmp.ne.s32.totalorder %s42, %s58
      %p60 = scmp.eq.s32.totalorder %s20, 0
      %p61 = por %p59, %p60
      %s63 = sadd.s32 %s62, 1
      %p66 = scmp.eq.s32.totalorder %s14, 3
      %p67 = scmp.ne.s32.totalorder %s62, %s64
      %p68 = scmp.eq.s32.totalorder %s14, 0
      %p69 = por %p67, %p68
      %p70 = scmp.ne.s32.totalorder %s62, %s64
      %p71 = scmp.eq.s32.totalorder %s19, 3
      %p72 = por %p70, %p71
      %p73 = scmp.ne.s32.totalorder %s64, %s65
      %p74 = scmp.eq.s32.totalorder %s19, 0
      %p75 = por %p73, %p74
      %p76 = scmp.ne.s32.totalorder %s64, %s65
      %p77 = scmp.eq.s32.totalorder %s20, 3
      %p78 = por %p76, %p77
      %p80 = scmp.ne.s32.totalorder %s65, %s79
      %p81 = scmp.eq.s32.totalorder %s20, 0
      %p82 = por %p80, %p81
      %s84 = sadd.s32 %s83, 1
      %p87 = scmp.eq.s32.totalorder %s14, 3
      %p88 = scmp.ne.s32.totalorder %s83, %s85
      %p89 = scmp.eq.s32.totalorder %s14, 0
      %p90 = por %p88, %p89
      %p91 = scmp.ne.s32.totalorder %s83, %s85
      %p92 = scmp.eq.s32.totalorder %s19, 3
      %p93 = por %p91, %p92
      %p94 = scmp.ne.s32.totalorder %s85, %s86
      %p95 = scmp.eq.s32.totalorder %s19, 0
      %p96 = por %p94, %p95
      %p97 = scmp.ne.s32.totalorder %s85, %s86
      %p98 = scmp.eq.s32.totalorder %s20, 3
      %p99 = por %p97, %p98
      %p101 = scmp.ne.s32.totalorder %s86, %s100
      %p102 = scmp.eq.s32.totalorder %s20, 0
      %p103 = por %p101, %p102
      %s104 = ssub.s32 %s21, %s33
      %s105 = ssub.s32 %s22, %s29
      %s106 = sor.u32 %s104, %s105
      %p107 = scmp.eq.s32.totalorder %s106, 0
      %s109 = sadd.s32 %s108, 1
      %s110 = scalar_select %p107, %s108, %s109
      %p113 = pneg %p107
      %p114 = scmp.eq.s32.totalorder %s14, 3
      %p115 = por %p113, %p114
      %p116 = scmp.ne.s32.totalorder %s108, %s111
      %p117 = scmp.eq.s32.totalorder %s14, 0
      %p118 = por %p116, %p117
      %p119 = scmp.ne.s32.totalorder %s108, %s111
      %p120 = scmp.eq.s32.totalorder %s19, 3
      %p121 = por %p119, %p120
      %p122 = scmp.ne.s32.totalorder %s111, %s112
      %p123 = scmp.eq.s32.totalorder %s19, 0
      %p124 = por %p122, %p123
      %p125 = scmp.ne.s32.totalorder %s111, %s112
      %p126 = scmp.eq.s32.totalorder %s20, 3
      %p127 = por %p125, %p126
      %p129 = scmp.ne.s32.totalorder %s112, %s128
      %p130 = scmp.eq.s32.totalorder %s20, 0
      %p131 = por %p129, %p130
      %p132 = scmp.le.s32.totalorder 1, %s14
      %p133 = scmp.lt.s32.totalorder %s14, 5
      %p134 = pnand %p132, %p133
      %p135 = pneg %p134
      // Predicated region
      $region9: #{tpu_custom_call.1} parent=5 // pred_check
        _
      $region10: #{tpu_custom_call.1} parent=5 // pred_check_branch
        %137 = sbr.rel (%p134) target = $region12
      $region11: #{tpu_custom_call.1} parent=5 // pred_region
        %s138 = ssub.s32 %s14, 1
        // Predicated region
        $region13: #{tpu_custom_call.1} parent=11 // pred_check
          %p139 = pneg %p75
        $region14: #{tpu_custom_call.1} parent=11 // pred_check_branch
          %141 = sbr.rel (%p139) target = $region16
        $region15: #{tpu_custom_call.1} parent=11 // pred_region
          %s143 = ssub.s32 46080, 46080
          %144 = vsyncadd [#allocation3], %s143
          %s145 = sshll.u32 [#allocation2], 4
          %s146 = int_to_ptr.vmem [resolvable:$true] %s145
          %151 = dma.hbm_to_vmem [thread:$0]  %s1, 46080, %s146, [#allocation3], 128, 128, 8
        $region16: #{tpu_custom_call.1} parent=11 // pred_fallthru
          _
        // Predicated region
        $region17: #{tpu_custom_call.1} parent=11 // pred_check
          %p152 = pneg %p96
        $region18: #{tpu_custom_call.1} parent=11 // pred_check_branch
          %154 = sbr.rel (%p152) target = $region20
        $region19: #{tpu_custom_call.1} parent=11 // pred_region
          %s156 = ssub.s32 32, 32
          %157 = vsyncadd [#allocation6], %s156
          %s159 = sshll.u32 [#allocation5], 4
          %s160 = int_to_ptr.vmem [resolvable:$true] %s159
          %162 = dma.hbm_to_vmem [thread:$0]  %s2, 32, %s160, [#allocation6]
        $region20: #{tpu_custom_call.1} parent=11 // pred_fallthru
          _
      $region12: #{tpu_custom_call.1} parent=5 // pred_fallthru
        _
      %p163 = scmp.lt.s32.totalorder %s14, 4
      // Predicated region
      $region21: #{tpu_custom_call.1} parent=5 // pred_check
        %p164 = pneg %p163
      $region22: #{tpu_custom_call.1} parent=5 // pred_check_branch
        %166 = sbr.rel (%p164) target = $region24
      $region23: #{tpu_custom_call.1} parent=5 // pred_region
        // Predicated region
        $region25: #{tpu_custom_call.1} parent=23 // pred_check
          %p167 = pneg %p48
        $region26: #{tpu_custom_call.1} parent=23 // pred_check_branch
          %169 = sbr.rel (%p167) target = $region28
        $region27: #{tpu_custom_call.1} parent=23 // pred_region
          %p170 = scmp.lt.s32.totalorder %s21, 1
          %s171 = scalar_select %p170, %s21, 1
          %p172 = scmp.lt.s32.totalorder %s22, 1
          %s173 = scalar_select %p172, %s22, 1
          %s174 = smul.addr %s173, 24
          %s175 = smul.addr %s171, 48
          %s176 = sadd.s32 %s174, %s175
          %s177 = smul.addr %s176, 4
          %s178 = scalar_lea.vmem %s0, %s177
        $region28: #{tpu_custom_call.1} parent=23 // pred_fallthru
          _
      $region24: #{tpu_custom_call.1} parent=5 // pred_fallthru
        _
      %p179 = scmp.le.s32.totalorder 1, %s14
      %p180 = scmp.lt.s32.totalorder %s14, 5
      %p181 = pnand %p179, %p180
      %p182 = pneg %p181
      // Predicated region
      $region29: #{tpu_custom_call.1} parent=5 // pred_check
        _
      $region30: #{tpu_custom_call.1} parent=5 // pred_check_branch
        %184 = sbr.rel (%p181) target = $region32
      $region31: #{tpu_custom_call.1} parent=5 // pred_region
        %s185 = ssub.s32 %s14, 1
        // Predicated region
        $region33: #{tpu_custom_call.1} parent=31 // pred_check
          %p186 = pneg %p75
        $region34: #{tpu_custom_call.1} parent=31 // pred_check_branch
          %188 = sbr.rel (%p186) target = $region36
        $region35: #{tpu_custom_call.1} parent=31 // pred_region
          %189 = dma.done [#allocation3], 46080
        $region36: #{tpu_custom_call.1} parent=31 // pred_fallthru
          _
        // Predicated region
        $region37: #{tpu_custom_call.1} parent=31 // pred_check
          %p190 = pneg %p96
        $region38: #{tpu_custom_call.1} parent=31 // pred_check_branch
          %192 = sbr.rel (%p190) target = $region40
        $region39: #{tpu_custom_call.1} parent=31 // pred_region
          %193 = dma.done [#allocation6], 32
        $region40: #{tpu_custom_call.1} parent=31 // pred_fallthru
          _
        %p194 = scmp.lt.s32.totalorder %s23, 1
        %s195 = scalar_select %p194, %s23, 1
        %p196 = scmp.lt.s32.totalorder %s24, 1
        %s197 = scalar_select %p196, %s24, 1
        %s198 = smul.addr %s197, 24
        %s199 = smul.addr %s195, 48
        %s200 = sadd.s32 %s198, %s199
        %s201 = smul.addr %s200, 4
        %s202 = scalar_lea.vmem %s0, %s201
        %p203 = pneg %p54
        %p204 = pneg %p51
        %p205 = pneg %p75
        %p206 = pneg %p72
        %p207 = pneg %p96
        %p208 = pneg %p93
        %p209 = pneg %p124
        %p210 = pneg %p121
        %s211 = sand.u32 %s111, 1
        %s212 = scalar_lea.sflag [#allocation4], %s211
        %s213 = sand.u32 %s111, 1
        %s214 = smul.addr %s213, 32
        %s215 = scalar_lea.vmem [#allocation7], %s214
        %p216 = scmp.lt.s32.totalorder %s23, 1
        %s217 = scalar_select %p216, %s23, 1
        %p218 = scmp.lt.s32.totalorder %s24, 1
        %s219 = scalar_select %p218, %s24, 1
        %s220 = smul.addr %s219, 24
        %s221 = smul.addr %s217, 48
        %s222 = sadd.s32 %s220, %s221
        %s223 = smul.addr %s222, 4
        %s224 = scalar_lea.vmem %s0, %s223
        %v226 = vld [vmem:[%s224] sm:$0xff]
        %v227 = vld [vmem:[%s224 + $0x8] sm:$0xf]
        %v228 = vld [vmem:[%s224 + $0xc] sm:$0x11]
        %v229 = vld [vmem:[%s224 + $0x14] sm:$0x1]
        %v230 = vld [vmem:[%s224 + $0x18] sm:$0xff]
        %v231 = vld [vmem:[%s224 + $0x20] sm:$0xf]
        %v232 = vld [vmem:[%s224 + $0x24] sm:$0x11]
        %v233 = vld [vmem:[%s224 + $0x2c] sm:$0x1]
        %v234 = vld [vmem:[%s224 + $0x30] sm:$0xff]
        %v235 = vld [vmem:[%s224 + $0x38] sm:$0xf]
        %v236 = vld [vmem:[%s224 + $0x3c] sm:$0x11]
        %v237 = vld [vmem:[%s224 + $0x44] sm:$0x1]
        %v238 = vld [vmem:[%s224 + $0x48] sm:$0xff]
        %v239 = vld [vmem:[%s224 + $0x50] sm:$0xf]
        %v240 = vld [vmem:[%s224 + $0x54] sm:$0x11]
        %v241 = vld [vmem:[%s224 + $0x5c] sm:$0x1]
        %v242 = vld [vmem:[#allocation2] sm:$0xff]
        %v243 = vld [vmem:[#allocation2 + $0x8] sm:$0xff]
        %v244 = vld [vmem:[#allocation2 + $0x10] sm:$0xff]
        %v245 = vld [vmem:[#allocation2 + $0x18] sm:$0xff]
        %v246 = vld [vmem:[#allocation2 + $0x20] sm:$0xff]
        %v247 = vld [vmem:[#allocation2 + $0x28] sm:$0xff]
        %v248 = vld [vmem:[#allocation2 + $0x30] sm:$0xff]
        %v249 = vld [vmem:[#allocation2 + $0x38] sm:$0xff]
        %v250 = vld [vmem:[#allocation2 + $0x40] sm:$0xff]
        %v251 = vld [vmem:[#allocation2 + $0x48] sm:$0xff]
        %v252 = vld [vmem:[#allocation2 + $0x50] sm:$0xff]
        %v253 = vld [vmem:[#allocation2 + $0x58] sm:$0xff]
        %v254 = vld [vmem:[#allocation2 + $0x60] sm:$0xff]
        %v255 = vld [vmem:[#allocation2 + $0x68] sm:$0xff]
        %v256 = vld [vmem:[#allocation2 + $0x70] sm:$0xff]
        %v257 = vld [vmem:[#allocation2 + $0x78] sm:$0xff]
        %v258 = vld [vmem:[#allocation2 + $0x80] sm:$0xff]
        %v259 = vld [vmem:[#allocation2 + $0x88] sm:$0xff]
        %v260 = vld [vmem:[#allocation2 + $0x90] sm:$0xff]
        %v261 = vld [vmem:[#allocation2 + $0x98] sm:$0xff]
        %v262 = vld [vmem:[#allocation2 + $0xa0] sm:$0xff]
        %v263 = vld [vmem:[#allocation2 + $0xa8] sm:$0xff]
        %v264 = vld [vmem:[#allocation2 + $0xb0] sm:$0xff]
        %v265 = vld [vmem:[#allocation2 + $0xb8] sm:$0xff]
        %v266 = vld [vmem:[#allocation2 + $0xc0] sm:$0xff]
        %v267 = vld [vmem:[#allocation2 + $0xc8] sm:$0xff]
        %v268 = vld [vmem:[#allocation2 + $0xd0] sm:$0xff]
        %v269 = vld [vmem:[#allocation2 + $0xd8] sm:$0xff]
        %v270 = vld [vmem:[#allocation2 + $0xe0] sm:$0xff]
        %v271 = vld [vmem:[#allocation2 + $0xe8] sm:$0xff]
        %v272 = vld [vmem:[#allocation2 + $0xf0] sm:$0xff]
        %v273 = vld [vmem:[#allocation2 + $0xf8] sm:$0xff]
        %v274 = vld [vmem:[#allocation2 + $0x100] sm:$0xff]
        %v275 = vld [vmem:[#allocation2 + $0x108] sm:$0xff]
        %v276 = vld [vmem:[#allocation2 + $0x110] sm:$0xff]
        %v277 = vld [vmem:[#allocation2 + $0x118] sm:$0xff]
        %v278 = vld [vmem:[#allocation2 + $0x120] sm:$0xff]
        %v279 = vld [vmem:[#allocation2 + $0x128] sm:$0xff]
        %v280 = vld [vmem:[#allocation2 + $0x130] sm:$0xff]
        %v281 = vld [vmem:[#allocation2 + $0x138] sm:$0xff]
        %vm282 = vsmask.f32 3328
        %vm283 = vsmask.f32 7440
        %vm284 = vmor %vm282, %vm283
        %v286 = vshrl.u32 %v226, 16
        %v288 = vrot.slane %v286, 4
        %v289 = vshll.u32 %v226, 16
        %v291 = vrot.slane %v289, 5
        %v292 = vor.u32 %v288, %v291
        %v293 = vrot.slane %v292, 4
        %v295 = vshll.u32 %v228, 16
        %v297 = vrot.slane %v295, 5
        %v298 = vsel %vm284, %v293, %v297
        %v300 = vshrl.u32 %v227, 16
        %v302 = vrot.slane %v300, 4
        %v303 = vshll.u32 %v227, 16
        %v305 = vrot.slane %v303, 5
        %v306 = vor.u32 %v302, %v305
        %v307 = vrot.slane %v306, 4
        %v309 = vshll.u32 %v229, 16
        %v311 = vrot.slane %v309, 5
        %v312 = vsel %vm284, %v307, %v311
        %v314 = vshrl.u32 %v230, 16
        %v316 = vrot.slane %v314, 4
        %v317 = vshll.u32 %v230, 16
        %v319 = vrot.slane %v317, 5
        %v320 = vor.u32 %v316, %v319
        %v321 = vrot.slane %v320, 4
        %v323 = vshll.u32 %v232, 16
        %v325 = vrot.slane %v323, 5
        %v326 = vsel %vm284, %v321, %v325
        %v328 = vshrl.u32 %v231, 16
        %v330 = vrot.slane %v328, 4
        %v331 = vshll.u32 %v231, 16
        %v333 = vrot.slane %v331, 5
        %v334 = vor.u32 %v330, %v333
        %v335 = vrot.slane %v334, 4
        %v337 = vshll.u32 %v233, 16
        %v339 = vrot.slane %v337, 5
        %v340 = vsel %vm284, %v335, %v339
        %s341 = scalar_lea.vmem [#allocation2], 320
        %v342 = vld [vmem:[%s341] sm:$0xff]
        %v343 = vld [vmem:[%s341 + $0x8] sm:$0xff]
        %v344 = vld [vmem:[%s341 + $0x10] sm:$0xff]
        %v345 = vld [vmem:[%s341 + $0x18] sm:$0xff]
        %v346 = vld [vmem:[%s341 + $0x20] sm:$0xff]
        %v347 = vld [vmem:[%s341 + $0x28] sm:$0xff]
        %v348 = vld [vmem:[%s341 + $0x30] sm:$0xff]
        %v349 = vld [vmem:[%s341 + $0x38] sm:$0xff]
        %v350 = vld [vmem:[%s341 + $0x40] sm:$0xff]
        %v351 = vld [vmem:[%s341 + $0x48] sm:$0xff]
        %v352 = vld [vmem:[%s341 + $0x50] sm:$0xff]
        %v353 = vld [vmem:[%s341 + $0x58] sm:$0xff]
        %v354 = vld [vmem:[%s341 + $0x60] sm:$0xff]
        %v355 = vld [vmem:[%s341 + $0x68] sm:$0xff]
        %v356 = vld [vmem:[%s341 + $0x70] sm:$0xff]
        %v357 = vld [vmem:[%s341 + $0x78] sm:$0xff]
        %v358 = vld [vmem:[%s341 + $0x80] sm:$0xff]
        %v359 = vld [vmem:[%s341 + $0x88] sm:$0xff]
        %v360 = vld [vmem:[%s341 + $0x90] sm:$0xff]
        %v361 = vld [vmem:[%s341 + $0x98] sm:$0xff]
        %v362 = vld [vmem:[%s341 + $0xa0] sm:$0xff]
        %v363 = vld [vmem:[%s341 + $0xa8] sm:$0xff]
        %v364 = vld [vmem:[%s341 + $0xb0] sm:$0xff]
        %v365 = vld [vmem:[%s341 + $0xb8] sm:$0xff]
        %v366 = vld [vmem:[%s341 + $0xc0] sm:$0xff]
        %v367 = vld [vmem:[%s341 + $0xc8] sm:$0xff]
        %v368 = vld [vmem:[%s341 + $0xd0] sm:$0xff]
        %v369 = vld [vmem:[%s341 + $0xd8] sm:$0xff]
        %v370 = vld [vmem:[%s341 + $0xe0] sm:$0xff]
        %v371 = vld [vmem:[%s341 + $0xe8] sm:$0xff]
        %v372 = vld [vmem:[%s341 + $0xf0] sm:$0xff]
        %v373 = vld [vmem:[%s341 + $0xf8] sm:$0xff]
        %v374 = vld [vmem:[%s341 + $0x100] sm:$0xff]
        %v375 = vld [vmem:[%s341 + $0x108] sm:$0xff]
        %v376 = vld [vmem:[%s341 + $0x110] sm:$0xff]
        %v377 = vld [vmem:[%s341 + $0x118] sm:$0xff]
        %v378 = vld [vmem:[%s341 + $0x120] sm:$0xff]
        %v379 = vld [vmem:[%s341 + $0x128] sm:$0xff]
        %v380 = vld [vmem:[%s341 + $0x130] sm:$0xff]
        %v381 = vld [vmem:[%s341 + $0x138] sm:$0xff]
        %v382 = vunpack.c.l.b16 %v298
        %v383 = vunpack.c.h.b16 %v298
        %v384 = vunpack.c.l.b16 %v312
        %v385 = vunpack.c.l.b16 %v326
        %v386 = vunpack.c.h.b16 %v326
        %v387 = vunpack.c.l.b16 %v340
        %v388 = vpack.c.b16 %v385, %v382
        %v389 = vpack.c.b16 %v386, %v383
        %v390 = vpack.c.b16 %v387, %v384
        %v433 = vunpack.c.l.b16 %v342
        %v434 = vunpack.c.h.b16 %v342
        %v435 = vunpack.c.l.b16 %v343
        %v436 = vunpack.c.h.b16 %v343
        %v437 = vunpack.c.l.b16 %v344
        %v438 = vunpack.c.h.b16 %v344
        %v439 = vunpack.c.l.b16 %v345
        %v440 = vunpack.c.h.b16 %v345
        %v441 = vunpack.c.l.b16 %v346
        %v442 = vunpack.c.h.b16 %v346
        %v443 = vunpack.c.l.b16 %v347
        %v444 = vunpack.c.h.b16 %v347
        %v445 = vunpack.c.l.b16 %v348
        %v446 = vunpack.c.h.b16 %v348
        %v447 = vunpack.c.l.b16 %v349
        %v448 = vunpack.c.h.b16 %v349
        %v449 = vunpack.c.l.b16 %v350
        %v450 = vunpack.c.h.b16 %v350
        %v451 = vunpack.c.l.b16 %v351
        %v452 = vunpack.c.h.b16 %v351
        %v453 = vunpack.c.l.b16 %v352
        %v454 = vunpack.c.h.b16 %v352
        %v455 = vunpack.c.l.b16 %v353
        %v456 = vunpack.c.h.b16 %v353
        %v457 = vunpack.c.l.b16 %v354
        %v458 = vunpack.c.h.b16 %v354
        %v459 = vunpack.c.l.b16 %v355
        %v460 = vunpack.c.h.b16 %v355
        %v461 = vunpack.c.l.b16 %v356
        %v462 = vunpack.c.h.b16 %v356
        %v463 = vunpack.c.l.b16 %v357
        %v464 = vunpack.c.h.b16 %v357
        %v465 = vunpack.c.l.b16 %v358
        %v466 = vunpack.c.h.b16 %v358
        %v467 = vunpack.c.l.b16 %v359
        %v468 = vunpack.c.h.b16 %v359
        %v469 = vunpack.c.l.b16 %v360
        %v470 = vunpack.c.h.b16 %v360
        %v471 = vunpack.c.l.b16 %v361
        %v472 = vunpack.c.h.b16 %v361
        %v473 = vunpack.c.l.b16 %v362
        %v474 = vunpack.c.h.b16 %v362
        %v475 = vunpack.c.l.b16 %v363
        %v476 = vunpack.c.h.b16 %v363
        %v477 = vunpack.c.l.b16 %v364
        %v478 = vunpack.c.h.b16 %v364
        %v479 = vunpack.c.l.b16 %v365
        %v480 = vunpack.c.h.b16 %v365
        %v481 = vunpack.c.l.b16 %v366
        %v482 = vunpack.c.h.b16 %v366
        %v483 = vunpack.c.l.b16 %v367
        %v484 = vunpack.c.h.b16 %v367
        %v485 = vunpack.c.l.b16 %v368
        %v486 = vunpack.c.h.b16 %v368
        %v487 = vunpack.c.l.b16 %v369
        %v488 = vunpack.c.h.b16 %v369
        %v489 = vunpack.c.l.b16 %v370
        %v490 = vunpack.c.h.b16 %v370
        %v491 = vunpack.c.l.b16 %v371
        %v492 = vunpack.c.h.b16 %v371
        %v493 = vunpack.c.l.b16 %v372
        %v494 = vunpack.c.h.b16 %v372
        %v495 = vunpack.c.l.b16 %v373
        %v496 = vunpack.c.h.b16 %v373
        %v497 = vunpack.c.l.b16 %v374
        %v498 = vunpack.c.h.b16 %v374
        %v499 = vunpack.c.l.b16 %v375
        %v500 = vunpack.c.h.b16 %v375
        %v501 = vunpack.c.l.b16 %v376
        %v502 = vunpack.c.h.b16 %v376
        %v503 = vunpack.c.l.b16 %v377
        %v504 = vunpack.c.h.b16 %v377
        %v505 = vunpack.c.l.b16 %v378
        %v506 = vunpack.c.h.b16 %v378
        %v507 = vunpack.c.l.b16 %v379
        %v508 = vunpack.c.h.b16 %v379
        %v509 = vunpack.c.l.b16 %v380
        %v510 = vunpack.c.h.b16 %v380
        %v511 = vunpack.c.l.b16 %v381
        %v512 = vunpack.c.h.b16 %v381
        %v513 = vpack.c.b16 %v435, %v433
        %v514 = vpack.c.b16 %v436, %v434
        %v515 = vpack.c.b16 %v439, %v437
        %v516 = vpack.c.b16 %v440, %v438
        %v517 = vpack.c.b16 %v443, %v441
        %v518 = vpack.c.b16 %v444, %v442
        %v519 = vpack.c.b16 %v447, %v445
        %v520 = vpack.c.b16 %v448, %v446
        %v521 = vpack.c.b16 %v451, %v449
        %v522 = vpack.c.b16 %v452, %v450
        %v523 = vpack.c.b16 %v455, %v453
        %v524 = vpack.c.b16 %v456, %v454
        %v525 = vpack.c.b16 %v459, %v457
        %v526 = vpack.c.b16 %v460, %v458
        %v527 = vpack.c.b16 %v463, %v461
        %v528 = vpack.c.b16 %v464, %v462
        %v529 = vpack.c.b16 %v467, %v465
        %v530 = vpack.c.b16 %v468, %v466
        %v531 = vpack.c.b16 %v471, %v469
        %v532 = vpack.c.b16 %v472, %v470
        %v533 = vpack.c.b16 %v475, %v473
        %v534 = vpack.c.b16 %v476, %v474
        %v535 = vpack.c.b16 %v479, %v477
        %v536 = vpack.c.b16 %v480, %v478
        %v537 = vpack.c.b16 %v483, %v481
        %v538 = vpack.c.b16 %v484, %v482
        %v539 = vpack.c.b16 %v487, %v485
        %v540 = vpack.c.b16 %v488, %v486
        %v541 = vpack.c.b16 %v491, %v489
        %v542 = vpack.c.b16 %v492, %v490
        %v543 = vpack.c.b16 %v495, %v493
        %v544 = vpack.c.b16 %v496, %v494
        %v545 = vpack.c.b16 %v499, %v497
        %v546 = vpack.c.b16 %v500, %v498
        %v547 = vpack.c.b16 %v503, %v501
        %v548 = vpack.c.b16 %v504, %v502
        %v549 = vpack.c.b16 %v507, %v505
        %v550 = vpack.c.b16 %v508, %v506
        %v551 = vpack.c.b16 %v511, %v509
        %v552 = vpack.c.b16 %v512, %v510
        %vm593 = vcmask 523264
        %v595 = vsel %vm593, %v390, 0
        %597 = vmatprep.subr.bf16.mxu0 %v514
        %598 = vmatpush1.bf16.msra.mxu0 %v513
        %599 = vmatprep.subr.bf16.mxu0 %v516
        %600 = vmatpush1.bf16.msra.mxu0 %v515
        %601 = vmatprep.subr.bf16.mxu0 %v518
        %602 = vmatpush1.bf16.msra.mxu0 %v517
        %603 = vmatprep.subr.bf16.mxu0 %v520
        %604 = vmatpush1.bf16.msra.mxu0 %v519
        %605 = vmatprep.subr.bf16.mxu0 %v522
        %606 = vmatpush1.bf16.msra.mxu0 %v521
        %607 = vmatprep.subr.bf16.mxu0 %v524
        %608 = vmatpush1.bf16.msra.mxu0 %v523
        %609 = vmatprep.subr.bf16.mxu0 %v526
        %610 = vmatpush1.bf16.msra.mxu0 %v525
        %611 = vmatprep.subr.bf16.mxu0 %v528
        %612 = vmatpush1.bf16.msra.mxu0 %v527
        %613 = vmatprep.subr.bf16.mxu0 %v530
        %614 = vmatpush1.bf16.msra.mxu0 %v529
        %615 = vmatprep.subr.bf16.mxu0 %v532
        %616 = vmatpush1.bf16.msra.mxu0 %v531
        %617 = vmatprep.subr.bf16.mxu0 %v534
        %618 = vmatpush1.bf16.msra.mxu0 %v533
        %619 = vmatprep.subr.bf16.mxu0 %v536
        %620 = vmatpush1.bf16.msra.mxu0 %v535
        %621 = vmatprep.subr.bf16.mxu0 %v538
        %622 = vmatpush1.bf16.msra.mxu0 %v537
        %623 = vmatprep.subr.bf16.mxu0 %v540
        %624 = vmatpush1.bf16.msra.mxu0 %v539
        %625 = vmatprep.subr.bf16.mxu0 %v542
        %626 = vmatpush1.bf16.msra.mxu0 %v541
        %627 = vmatprep.subr.bf16.mxu0 %v544
        %628 = vmatpush1.bf16.msra.mxu0 %v543
        %629 = vmatprep.mubr.bf16.mxu0 %v389
        %630 = vmatmul.mubr.bf16.gmra.mrb[0].mxu0 %v388
        %v631 = vpop.f32.mrb[0].mxu0
        %v632 = vadd.f32 0.0, %v631
        %v633 = vpop.f32.mrb[0].mxu0
        %v634 = vadd.f32 0.0, %v633
        %v635 = vpop.f32.mrb[0].mxu0
        %v636 = vadd.f32 0.0, %v635
        %v637 = vpop.f32.mrb[0].mxu0
        %v638 = vadd.f32 0.0, %v637
        %639 = vdwg.mxu0
        %640 = vmatprep.subr.bf16.mxu0 %v546
        %641 = vmatpush1.bf16.msra.mxu0 %v545
        %642 = vmatprep.subr.bf16.mxu0 %v548
        %643 = vmatpush1.bf16.msra.mxu0 %v547
        %644 = vmatprep.subr.bf16.mxu0 %v550
        %645 = vmatpush1.bf16.msra.mxu0 %v549
        %646 = vmatprep.subr.bf16.mxu0 %v552
        %647 = vmatpush1.bf16.msra.mxu0 %v551
        %648 = vmatprep.subr.bf16.mxu0 0
        %649 = vmatpush1.bf16.msra.mxu0 0
        %650 = vmatprep.subr.bf16.mxu0 0
        %651 = vmatpush1.bf16.msra.mxu0 0
        %652 = vmatprep.subr.bf16.mxu0 0
        %653 = vmatpush1.bf16.msra.mxu0 0
        %654 = vmatprep.subr.bf16.mxu0 0
        %655 = vmatpush1.bf16.msra.mxu0 0
        %656 = vmatprep.subr.bf16.mxu0 0
        %657 = vmatpush1.bf16.msra.mxu0 0
        %658 = vmatprep.subr.bf16.mxu0 0
        %659 = vmatpush1.bf16.msra.mxu0 0
        %660 = vmatprep.subr.bf16.mxu0 0
        %661 = vmatpush1.bf16.msra.mxu0 0
        %662 = vmatprep.subr.bf16.mxu0 0
        %663 = vmatpush1.bf16.msra.mxu0 0
        %664 = vmatprep.subr.bf16.mxu0 0
        %665 = vmatpush1.bf16.msra.mxu0 0
        %666 = vmatprep.subr.bf16.mxu0 0
        %667 = vmatpush1.bf16.msra.mxu0 0
        %668 = vmatprep.subr.bf16.mxu0 0
        %669 = vmatpush1.bf16.msra.mxu0 0
        %670 = vmatprep.subr.bf16.mxu0 0
        %671 = vmatpush1.bf16.msra.mxu0 0
        %672 = vmatprep.mubr.bf16.mxu0 0
        %673 = vmatmul.mubr.bf16.gmra.mrb[0].mxu0 %v595
        %v674 = vpop.f32.mrb[0].mxu0
        %v675 = vadd.f32 %v632, %v674
        %v676 = vpop.f32.mrb[0].mxu0
        %v677 = vadd.f32 %v634, %v676
        %v678 = vpop.f32.mrb[0].mxu0
        %v679 = vadd.f32 %v636, %v678
        %v680 = vpop.f32.mrb[0].mxu0
        %v681 = vadd.f32 %v638, %v680
        %682 = vdwg.mxu0
        %v687 = vunpack.c.l.b16 %v226
        %v688 = vunpack.c.h.b16 %v226
        %v689 = vunpack.c.l.b16 %v227
        %v690 = vunpack.c.l.b16 %v230
        %v691 = vunpack.c.h.b16 %v230
        %v692 = vunpack.c.l.b16 %v231
        %v693 = vpack.c.b16 %v690, %v687
        %v694 = vpack.c.b16 %v691, %v688
        %v695 = vpack.c.b16 %v692, %v689
        %v738 = vunpack.c.l.b16 %v242
        %v739 = vunpack.c.h.b16 %v242
        %v740 = vunpack.c.l.b16 %v243
        %v741 = vunpack.c.h.b16 %v243
        %v742 = vunpack.c.l.b16 %v244
        %v743 = vunpack.c.h.b16 %v244
        %v744 = vunpack.c.l.b16 %v245
        %v745 = vunpack.c.h.b16 %v245
        %v746 = vunpack.c.l.b16 %v246
        %v747 = vunpack.c.h.b16 %v246
        %v748 = vunpack.c.l.b16 %v247
        %v749 = vunpack.c.h.b16 %v247
        %v750 = vunpack.c.l.b16 %v248
        %v751 = vunpack.c.h.b16 %v248
        %v752 = vunpack.c.l.b16 %v249
        %v753 = vunpack.c.h.b16 %v249
        %v754 = vunpack.c.l.b16 %v250
        %v755 = vunpack.c.h.b16 %v250
        %v756 = vunpack.c.l.b16 %v251
        %v757 = vunpack.c.h.b16 %v251
        %v758 = vunpack.c.l.b16 %v252
        %v759 = vunpack.c.h.b16 %v252
        %v760 = vunpack.c.l.b16 %v253
        %v761 = vunpack.c.h.b16 %v253
        %v762 = vunpack.c.l.b16 %v254
        %v763 = vunpack.c.h.b16 %v254
        %v764 = vunpack.c.l.b16 %v255
        %v765 = vunpack.c.h.b16 %v255
        %v766 = vunpack.c.l.b16 %v256
        %v767 = vunpack.c.h.b16 %v256
        %v768 = vunpack.c.l.b16 %v257
        %v769 = vunpack.c.h.b16 %v257
        %v770 = vunpack.c.l.b16 %v258
        %v771 = vunpack.c.h.b16 %v258
        %v772 = vunpack.c.l.b16 %v259
        %v773 = vunpack.c.h.b16 %v259
        %v774 = vunpack.c.l.b16 %v260
        %v775 = vunpack.c.h.b16 %v260
        %v776 = vunpack.c.l.b16 %v261
        %v777 = vunpack.c.h.b16 %v261
        %v778 = vunpack.c.l.b16 %v262
        %v779 = vunpack.c.h.b16 %v262
        %v780 = vunpack.c.l.b16 %v263
        %v781 = vunpack.c.h.b16 %v263
        %v782 = vunpack.c.l.b16 %v264
        %v783 = vunpack.c.h.b16 %v264
        %v784 = vunpack.c.l.b16 %v265
        %v785 = vunpack.c.h.b16 %v265
        %v786 = vunpack.c.l.b16 %v266
        %v787 = vunpack.c.h.b16 %v266
        %v788 = vunpack.c.l.b16 %v267
        %v789 = vunpack.c.h.b16 %v267
        %v790 = vunpack.c.l.b16 %v268
        %v791 = vunpack.c.h.b16 %v268
        %v792 = vunpack.c.l.b16 %v269
        %v793 = vunpack.c.h.b16 %v269
        %v794 = vunpack.c.l.b16 %v270
        %v795 = vunpack.c.h.b16 %v270
        %v796 = vunpack.c.l.b16 %v271
        %v797 = vunpack.c.h.b16 %v271
        %v798 = vunpack.c.l.b16 %v272
        %v799 = vunpack.c.h.b16 %v272
        %v800 = vunpack.c.l.b16 %v273
        %v801 = vunpack.c.h.b16 %v273
        %v802 = vunpack.c.l.b16 %v274
        %v803 = vunpack.c.h.b16 %v274
        %v804 = vunpack.c.l.b16 %v275
        %v805 = vunpack.c.h.b16 %v275
        %v806 = vunpack.c.l.b16 %v276
        %v807 = vunpack.c.h.b16 %v276
        %v808 = vunpack.c.l.b16 %v277
        %v809 = vunpack.c.h.b16 %v277
        %v810 = vunpack.c.l.b16 %v278
        %v811 = vunpack.c.h.b16 %v278
        %v812 = vunpack.c.l.b16 %v279
        %v813 = vunpack.c.h.b16 %v279
        %v814 = vunpack.c.l.b16 %v280
        %v815 = vunpack.c.h.b16 %v280
        %v816 = vunpack.c.l.b16 %v281
        %v817 = vunpack.c.h.b16 %v281
        %v818 = vpack.c.b16 %v740, %v738
        %v819 = vpack.c.b16 %v741, %v739
        %v820 = vpack.c.b16 %v744, %v742
        %v821 = vpack.c.b16 %v745, %v743
        %v822 = vpack.c.b16 %v748, %v746
        %v823 = vpack.c.b16 %v749, %v747
        %v824 = vpack.c.b16 %v752, %v750
        %v825 = vpack.c.b16 %v753, %v751
        %v826 = vpack.c.b16 %v756, %v754
        %v827 = vpack.c.b16 %v757, %v755
        %v828 = vpack.c.b16 %v760, %v758
        %v829 = vpack.c.b16 %v761, %v759
        %v830 = vpack.c.b16 %v764, %v762
        %v831 = vpack.c.b16 %v765, %v763
        %v832 = vpack.c.b16 %v768, %v766
        %v833 = vpack.c.b16 %v769, %v767
        %v834 = vpack.c.b16 %v772, %v770
        %v835 = vpack.c.b16 %v773, %v771
        %v836 = vpack.c.b16 %v776, %v774
        %v837 = vpack.c.b16 %v777, %v775
        %v838 = vpack.c.b16 %v780, %v778
        %v839 = vpack.c.b16 %v781, %v779
        %v840 = vpack.c.b16 %v784, %v782
        %v841 = vpack.c.b16 %v785, %v783
        %v842 = vpack.c.b16 %v788, %v786
        %v843 = vpack.c.b16 %v789, %v787
        %v844 = vpack.c.b16 %v792, %v790
        %v845 = vpack.c.b16 %v793, %v791
        %v846 = vpack.c.b16 %v796, %v794
        %v847 = vpack.c.b16 %v797, %v795
        %v848 = vpack.c.b16 %v800, %v798
        %v849 = vpack.c.b16 %v801, %v799
        %v850 = vpack.c.b16 %v804, %v802
        %v851 = vpack.c.b16 %v805, %v803
        %v852 = vpack.c.b16 %v808, %v806
        %v853 = vpack.c.b16 %v809, %v807
        %v854 = vpack.c.b16 %v812, %v810
        %v855 = vpack.c.b16 %v813, %v811
        %v856 = vpack.c.b16 %v816, %v814
        %v857 = vpack.c.b16 %v817, %v815
        %v899 = vsel %vm593, %v695, 0
        %901 = vmatprep.subr.bf16.mxu0 %v819
        %902 = vmatpush1.bf16.msra.mxu0 %v818
        %903 = vmatprep.subr.bf16.mxu0 %v821
        %904 = vmatpush1.bf16.msra.mxu0 %v820
        %905 = vmatprep.subr.bf16.mxu0 %v823
        %906 = vmatpush1.bf16.msra.mxu0 %v822
        %907 = vmatprep.subr.bf16.mxu0 %v825
        %908 = vmatpush1.bf16.msra.mxu0 %v824
        %909 = vmatprep.subr.bf16.mxu0 %v827
        %910 = vmatpush1.bf16.msra.mxu0 %v826
        %911 = vmatprep.subr.bf16.mxu0 %v829
        %912 = vmatpush1.bf16.msra.mxu0 %v828
        %913 = vmatprep.subr.bf16.mxu0 %v831
        %914 = vmatpush1.bf16.msra.mxu0 %v830
        %915 = vmatprep.subr.bf16.mxu0 %v833
        %916 = vmatpush1.bf16.msra.mxu0 %v832
        %917 = vmatprep.subr.bf16.mxu0 %v835
        %918 = vmatpush1.bf16.msra.mxu0 %v834
        %919 = vmatprep.subr.bf16.mxu0 %v837
        %920 = vmatpush1.bf16.msra.mxu0 %v836
        %921 = vmatprep.subr.bf16.mxu0 %v839
        %922 = vmatpush1.bf16.msra.mxu0 %v838
        %923 = vmatprep.subr.bf16.mxu0 %v841
        %924 = vmatpush1.bf16.msra.mxu0 %v840
        %925 = vmatprep.subr.bf16.mxu0 %v843
        %926 = vmatpush1.bf16.msra.mxu0 %v842
        %927 = vmatprep.subr.bf16.mxu0 %v845
        %928 = vmatpush1.bf16.msra.mxu0 %v844
        %929 = vmatprep.subr.bf16.mxu0 %v847
        %930 = vmatpush1.bf16.msra.mxu0 %v846
        %931 = vmatprep.subr.bf16.mxu0 %v849
        %932 = vmatpush1.bf16.msra.mxu0 %v848
        %933 = vmatprep.mubr.bf16.mxu0 %v694
        %934 = vmatmul.mubr.bf16.gmra.mrb[0].mxu0 %v693
        %v935 = vpop.f32.mrb[0].mxu0
        %v936 = vadd.f32 %v675, %v935
        %v937 = vpop.f32.mrb[0].mxu0
        %v938 = vadd.f32 %v677, %v937
        %v939 = vpop.f32.mrb[0].mxu0
        %v940 = vadd.f32 %v679, %v939
        %v941 = vpop.f32.mrb[0].mxu0
        %v942 = vadd.f32 %v681, %v941
        %943 = vdwg.mxu0
        %944 = vmatprep.subr.bf16.mxu0 %v851
        %945 = vmatpush1.bf16.msra.mxu0 %v850
        %946 = vmatprep.subr.bf16.mxu0 %v853
        %947 = vmatpush1.bf16.msra.mxu0 %v852
        %948 = vmatprep.subr.bf16.mxu0 %v855
        %949 = vmatpush1.bf16.msra.mxu0 %v854
        %950 = vmatprep.subr.bf16.mxu0 %v857
        %951 = vmatpush1.bf16.msra.mxu0 %v856
        %952 = vmatprep.subr.bf16.mxu0 0
        %953 = vmatpush1.bf16.msra.mxu0 0
        %954 = vmatprep.subr.bf16.mxu0 0
        %955 = vmatpush1.bf16.msra.mxu0 0
        %956 = vmatprep.subr.bf16.mxu0 0
        %957 = vmatpush1.bf16.msra.mxu0 0
        %958 = vmatprep.subr.bf16.mxu0 0
        %959 = vmatpush1.bf16.msra.mxu0 0
        %960 = vmatprep.subr.bf16.mxu0 0
        %961 = vmatpush1.bf16.msra.mxu0 0
        %962 = vmatprep.subr.bf16.mxu0 0
        %963 = vmatpush1.bf16.msra.mxu0 0
        %964 = vmatprep.subr.bf16.mxu0 0
        %965 = vmatpush1.bf16.msra.mxu0 0
        %966 = vmatprep.subr.bf16.mxu0 0
        %967 = vmatpush1.bf16.msra.mxu0 0
        %968 = vmatprep.subr.bf16.mxu0 0
        %969 = vmatpush1.bf16.msra.mxu0 0
        %970 = vmatprep.subr.bf16.mxu0 0
        %971 = vmatpush1.bf16.msra.mxu0 0
        %972 = vmatprep.subr.bf16.mxu0 0
        %973 = vmatpush1.bf16.msra.mxu0 0
        %974 = vmatprep.subr.bf16.mxu0 0
        %975 = vmatpush1.bf16.msra.mxu0 0
        %976 = vmatprep.mubr.bf16.mxu0 0
        %977 = vmatmul.mubr.bf16.gmra.mrb[0].mxu0 %v899
        %v978 = vpop.f32.mrb[0].mxu0
        %v979 = vadd.f32 %v936, %v978
        %v980 = vpop.f32.mrb[0].mxu0
        %v981 = vadd.f32 %v938, %v980
        %v982 = vpop.f32.mrb[0].mxu0
        %v983 = vadd.f32 %v940, %v982
        %v984 = vpop.f32.mrb[0].mxu0
        %v985 = vadd.f32 %v942, %v984
        %986 = vdwg.mxu0
        %vm991 = vcmask 1042432
        %vm992 = vcmask 1046532
        %vm993 = vmor %vm991, %vm992
        %v994 = vrot.slane %v226, 5
        %v995 = vrot.slane %v994, 4
        %v996 = vrot.slane %v228, 5
        %v997 = vsel %vm993, %v995, %v996
        %v998 = vrot.slane %v227, 5
        %v999 = vrot.slane %v998, 4
        %v1000 = vrot.slane %v229, 5
        %v1001 = vsel %vm993, %v999, %v1000
        %v1002 = vrot.slane %v230, 5
        %v1003 = vrot.slane %v1002, 4
        %v1004 = vrot.slane %v232, 5
        %v1005 = vsel %vm993, %v1003, %v1004
        %v1006 = vrot.slane %v231, 5
        %v1007 = vrot.slane %v1006, 4
        %v1008 = vrot.slane %v233, 5
        %v1009 = vsel %vm993, %v1007, %v1008
        %s1010 = scalar_lea.vmem [#allocation2], 640
        %v1011 = vld [vmem:[%s1010] sm:$0xff]
        %v1012 = vld [vmem:[%s1010 + $0x8] sm:$0xff]
        %v1013 = vld [vmem:[%s1010 + $0x10] sm:$0xff]
        %v1014 = vld [vmem:[%s1010 + $0x18] sm:$0xff]
        %v1015 = vld [vmem:[%s1010 + $0x20] sm:$0xff]
        %v1016 = vld [vmem:[%s1010 + $0x28] sm:$0xff]
        %v1017 = vld [vmem:[%s1010 + $0x30] sm:$0xff]
        %v1018 = vld [vmem:[%s1010 + $0x38] sm:$0xff]
        %v1019 = vld [vmem:[%s1010 + $0x40] sm:$0xff]
        %v1020 = vld [vmem:[%s1010 + $0x48] sm:$0xff]
        %v1021 = vld [vmem:[%s1010 + $0x50] sm:$0xff]
        %v1022 = vld [vmem:[%s1010 + $0x58] sm:$0xff]
        %v1023 = vld [vmem:[%s1010 + $0x60] sm:$0xff]
        %v1024 = vld [vmem:[%s1010 + $0x68] sm:$0xff]
        %v1025 = vld [vmem:[%s1010 + $0x70] sm:$0xff]
        %v1026 = vld [vmem:[%s1010 + $0x78] sm:$0xff]
        %v1027 = vld [vmem:[%s1010 + $0x80] sm:$0xff]
        %v1028 = vld [vmem:[%s1010 + $0x88] sm:$0xff]
        %v1029 = vld [vmem:[%s1010 + $0x90] sm:$0xff]
        %v1030 = vld [vmem:[%s1010 + $0x98] sm:$0xff]
        %v1031 = vld [vmem:[%s1010 + $0xa0] sm:$0xff]
        %v1032 = vld [vmem:[%s1010 + $0xa8] sm:$0xff]
        %v1033 = vld [vmem:[%s1010 + $0xb0] sm:$0xff]
        %v1034 = vld [vmem:[%s1010 + $0xb8] sm:$0xff]
        %v1035 = vld [vmem:[%s1010 + $0xc0] sm:$0xff]
        %v1036 = vld [vmem:[%s1010 + $0xc8] sm:$0xff]
        %v1037 = vld [vmem:[%s1010 + $0xd0] sm:$0xff]
        %v1038 = vld [vmem:[%s1010 + $0xd8] sm:$0xff]
        %v1039 = vld [vmem:[%s1010 + $0xe0] sm:$0xff]
        %v1040 = vld [vmem:[%s1010 + $0xe8] sm:$0xff]
        %v1041 = vld [vmem:[%s1010 + $0xf0] sm:$0xff]
        %v1042 = vld [vmem:[%s1010 + $0xf8] sm:$0xff]
        %v1043 = vld [vmem:[%s1010 + $0x100] sm:$0xff]
        %v1044 = vld [vmem:[%s1010 + $0x108] sm:$0xff]
        %v1045 = vld [vmem:[%s1010 + $0x110] sm:$0xff]
        %v1046 = vld [vmem:[%s1010 + $0x118] sm:$0xff]
        %v1047 = vld [vmem:[%s1010 + $0x120] sm:$0xff]
        %v1048 = vld [vmem:[%s1010 + $0x128] sm:$0xff]
        %v1049 = vld [vmem:[%s1010 + $0x130] sm:$0xff]
        %v1050 = vld [vmem:[%s1010 + $0x138] sm:$0xff]
        %v1051 = vunpack.c.l.b16 %v997
        %v1052 = vunpack.c.h.b16 %v997
        %v1053 = vunpack.c.l.b16 %v1001
        %v1054 = vunpack.c.l.b16 %v1005
        %v1055 = vunpack.c.h.b16 %v1005
        %v1056 = vunpack.c.l.b16 %v1009
        %v1057 = vpack.c.b16 %v1054, %v1051
        %v1058 = vpack.c.b16 %v1055, %v1052
        %v1059 = vpack.c.b16 %v1056, %v1053
        %v1102 = vunpack.c.l.b16 %v1011
        %v1103 = vunpack.c.h.b16 %v1011
        %v1104 = vunpack.c.l.b16 %v1012
        %v1105 = vunpack.c.h.b16 %v1012
        %v1106 = vunpack.c.l.b16 %v1013
        %v1107 = vunpack.c.h.b16 %v1013
        %v1108 = vunpack.c.l.b16 %v1014
        %v1109 = vunpack.c.h.b16 %v1014
        %v1110 = vunpack.c.l.b16 %v1015
        %v1111 = vunpack.c.h.b16 %v1015
        %v1112 = vunpack.c.l.b16 %v1016
        %v1113 = vunpack.c.h.b16 %v1016
        %v1114 = vunpack.c.l.b16 %v1017
        %v1115 = vunpack.c.h.b16 %v1017
        %v1116 = vunpack.c.l.b16 %v1018
        %v1117 = vunpack.c.h.b16 %v1018
        %v1118 = vunpack.c.l.b16 %v1019
        %v1119 = vunpack.c.h.b16 %v1019
        %v1120 = vunpack.c.l.b16 %v1020
        %v1121 = vunpack.c.h.b16 %v1020
        %v1122 = vunpack.c.l.b16 %v1021
        %v1123 = vunpack.c.h.b16 %v1021
        %v1124 = vunpack.c.l.b16 %v1022
        %v1125 = vunpack.c.h.b16 %v1022
        %v1126 = vunpack.c.l.b16 %v1023
        %v1127 = vunpack.c.h.b16 %v1023
        %v1128 = vunpack.c.l.b16 %v1024
        %v1129 = vunpack.c.h.b16 %v1024
        %v1130 = vunpack.c.l.b16 %v1025
        %v1131 = vunpack.c.h.b16 %v1025
        %v1132 = vunpack.c.l.b16 %v1026
        %v1133 = vunpack.c.h.b16 %v1026
        %v1134 = vunpack.c.l.b16 %v1027
        %v1135 = vunpack.c.h.b16 %v1027
        %v1136 = vunpack.c.l.b16 %v1028
        %v1137 = vunpack.c.h.b16 %v1028
        %v1138 = vunpack.c.l.b16 %v1029
        %v1139 = vunpack.c.h.b16 %v1029
        %v1140 = vunpack.c.l.b16 %v1030
        %v1141 = vunpack.c.h.b16 %v1030
        %v1142 = vunpack.c.l.b16 %v1031
        %v1143 = vunpack.c.h.b16 %v1031
        %v1144 = vunpack.c.l.b16 %v1032
        %v1145 = vunpack.c.h.b16 %v1032
        %v1146 = vunpack.c.l.b16 %v1033
        %v1147 = vunpack.c.h.b16 %v1033
        %v1148 = vunpack.c.l.b16 %v1034
        %v1149 = vunpack.c.h.b16 %v1034
        %v1150 = vunpack.c.l.b16 %v1035
        %v1151 = vunpack.c.h.b16 %v1035
        %v1152 = vunpack.c.l.b16 %v1036
        %v1153 = vunpack.c.h.b16 %v1036
        %v1154 = vunpack.c.l.b16 %v1037
        %v1155 = vunpack.c.h.b16 %v1037
        %v1156 = vunpack.c.l.b16 %v1038
        %v1157 = vunpack.c.h.b16 %v1038
        %v1158 = vunpack.c.l.b16 %v1039
        %v1159 = vunpack.c.h.b16 %v1039
        %v1160 = vunpack.c.l.b16 %v1040
        %v1161 = vunpack.c.h.b16 %v1040
        %v1162 = vunpack.c.l.b16 %v1041
        %v1163 = vunpack.c.h.b16 %v1041
        %v1164 = vunpack.c.l.b16 %v1042
        %v1165 = vunpack.c.h.b16 %v1042
        %v1166 = vunpack.c.l.b16 %v1043
        %v1167 = vunpack.c.h.b16 %v1043
        %v1168 = vunpack.c.l.b16 %v1044
        %v1169 = vunpack.c.h.b16 %v1044
        %v1170 = vunpack.c.l.b16 %v1045
        %v1171 = vunpack.c.h.b16 %v1045
        %v1172 = vunpack.c.l.b16 %v1046
        %v1173 = vunpack.c.h.b16 %v1046
        %v1174 = vunpack.c.l.b16 %v1047
        %v1175 = vunpack.c.h.b16 %v1047
        %v1176 = vunpack.c.l.b16 %v1048
        %v1177 = vunpack.c.h.b16 %v1048
        %v1178 = vunpack.c.l.b16 %v1049
        %v1179 = vunpack.c.h.b16 %v1049
        %v1180 = vunpack.c.l.b16 %v1050
        %v1181 = vunpack.c.h.b16 %v1050
        %v1182 = vpack.c.b16 %v1104, %v1102
        %v1183 = vpack.c.b16 %v1105, %v1103
        %v1184 = vpack.c.b16 %v1108, %v1106
        %v1185 = vpack.c.b16 %v1109, %v1107
        %v1186 = vpack.c.b16 %v1112, %v1110
        %v1187 = vpack.c.b16 %v1113, %v1111
        %v1188 = vpack.c.b16 %v1116, %v1114
        %v1189 = vpack.c.b16 %v1117, %v1115
        %v1190 = vpack.c.b16 %v1120, %v1118
        %v1191 = vpack.c.b16 %v1121, %v1119
        %v1192 = vpack.c.b16 %v1124, %v1122
        %v1193 = vpack.c.b16 %v1125, %v1123
        %v1194 = vpack.c.b16 %v1128, %v1126
        %v1195 = vpack.c.b16 %v1129, %v1127
        %v1196 = vpack.c.b16 %v1132, %v1130
        %v1197 = vpack.c.b16 %v1133, %v1131
        %v1198 = vpack.c.b16 %v1136, %v1134
        %v1199 = vpack.c.b16 %v1137, %v1135
        %v1200 = vpack.c.b16 %v1140, %v1138
        %v1201 = vpack.c.b16 %v1141, %v1139
        %v1202 = vpack.c.b16 %v1144, %v1142
        %v1203 = vpack.c.b16 %v1145, %v1143
        %v1204 = vpack.c.b16 %v1148, %v1146
        %v1205 = vpack.c.b16 %v1149, %v1147
        %v1206 = vpack.c.b16 %v1152, %v1150
        %v1207 = vpack.c.b16 %v1153, %v1151
        %v1208 = vpack.c.b16 %v1156, %v1154
        %v1209 = vpack.c.b16 %v1157, %v1155
        %v1210 = vpack.c.b16 %v1160, %v1158
        %v1211 = vpack.c.b16 %v1161, %v1159
        %v1212 = vpack.c.b16 %v1164, %v1162
        %v1213 = vpack.c.b16 %v1165, %v1163
        %v1214 = vpack.c.b16 %v1168, %v1166
        %v1215 = vpack.c.b16 %v1169, %v1167
        %v1216 = vpack.c.b16 %v1172, %v1170
        %v1217 = vpack.c.b16 %v1173, %v1171
        %v1218 = vpack.c.b16 %v1176, %v1174
        %v1219 = vpack.c.b16 %v1177, %v1175
        %v1220 = vpack.c.b16 %v1180, %v1178
        %v1221 = vpack.c.b16 %v1181, %v1179
        %v1263 = vsel %vm593, %v1059, 0
        %1265 = vmatprep.subr.bf16.mxu0 %v1183
        %1266 = vmatpush1.bf16.msra.mxu0 %v1182
        %1267 = vmatprep.subr.bf16.mxu0 %v1185
        %1268 = vmatpush1.bf16.msra.mxu0 %v1184
        %1269 = vmatprep.subr.bf16.mxu0 %v1187
        %1270 = vmatpush1.bf16.msra.mxu0 %v1186
        %1271 = vmatprep.subr.bf16.mxu0 %v1189
        %1272 = vmatpush1.bf16.msra.mxu0 %v1188
        %1273 = vmatprep.subr.bf16.mxu0 %v1191
        %1274 = vmatpush1.bf16.msra.mxu0 %v1190
        %1275 = vmatprep.subr.bf16.mxu0 %v1193
        %1276 = vmatpush1.bf16.msra.mxu0 %v1192
        %1277 = vmatprep.subr.bf16.mxu0 %v1195
        %1278 = vmatpush1.bf16.msra.mxu0 %v1194
        %1279 = vmatprep.subr.bf16.mxu0 %v1197
        %1280 = vmatpush1.bf16.msra.mxu0 %v1196
        %1281 = vmatprep.subr.bf16.mxu0 %v1199
        %1282 = vmatpush1.bf16.msra.mxu0 %v1198
        %1283 = vmatprep.subr.bf16.mxu0 %v1201
        %1284 = vmatpush1.bf16.msra.mxu0 %v1200
        %1285 = vmatprep.subr.bf16.mxu0 %v1203
        %1286 = vmatpush1.bf16.msra.mxu0 %v1202
        %1287 = vmatprep.subr.bf16.mxu0 %v1205
        %1288 = vmatpush1.bf16.msra.mxu0 %v1204
        %1289 = vmatprep.subr.bf16.mxu0 %v1207
        %1290 = vmatpush1.bf16.msra.mxu0 %v1206
        %1291 = vmatprep.subr.bf16.mxu0 %v1209
        %1292 = vmatpush1.bf16.msra.mxu0 %v1208
        %1293 = vmatprep.subr.bf16.mxu0 %v1211
        %1294 = vmatpush1.bf16.msra.mxu0 %v1210
        %1295 = vmatprep.subr.bf16.mxu0 %v1213
        %1296 = vmatpush1.bf16.msra.mxu0 %v1212
        %1297 = vmatprep.mubr.bf16.mxu0 %v1058
        %1298 = vmatmul.mubr.bf16.gmra.mrb[0].mxu0 %v1057
        %v1299 = vpop.f32.mrb[0].mxu0
        %v1300 = vadd.f32 0.0, %v1299
        %v1301 = vpop.f32.mrb[0].mxu0
        %v1302 = vadd.f32 0.0, %v1301
        %v1303 = vpop.f32.mrb[0].mxu0
        %v1304 = vadd.f32 0.0, %v1303
        %v1305 = vpop.f32.mrb[0].mxu0
        %v1306 = vadd.f32 0.0, %v1305
        %1307 = vdwg.mxu0
        %1308 = vmatprep.subr.bf16.mxu0 %v1215
        %1309 = vmatpush1.bf16.msra.mxu0 %v1214
        %1310 = vmatprep.subr.bf16.mxu0 %v1217
        %1311 = vmatpush1.bf16.msra.mxu0 %v1216
        %1312 = vmatprep.subr.bf16.mxu0 %v1219
        %1313 = vmatpush1.bf16.msra.mxu0 %v1218
        %1314 = vmatprep.subr.bf16.mxu0 %v1221
        %1315 = vmatpush1.bf16.msra.mxu0 %v1220
        %1316 = vmatprep.subr.bf16.mxu0 0
        %1317 = vmatpush1.bf16.msra.mxu0 0
        %1318 = vmatprep.subr.bf16.mxu0 0
        %1319 = vmatpush1.bf16.msra.mxu0 0
        %1320 = vmatprep.subr.bf16.mxu0 0
        %1321 = vmatpush1.bf16.msra.mxu0 0
        %1322 = vmatprep.subr.bf16.mxu0 0
        %1323 = vmatpush1.bf16.msra.mxu0 0
        %1324 = vmatprep.subr.bf16.mxu0 0
        %1325 = vmatpush1.bf16.msra.mxu0 0
        %1326 = vmatprep.subr.bf16.mxu0 0
        %1327 = vmatpush1.bf16.msra.mxu0 0
        %1328 = vmatprep.subr.bf16.mxu0 0
        %1329 = vmatpush1.bf16.msra.mxu0 0
        %1330 = vmatprep.subr.bf16.mxu0 0
        %1331 = vmatpush1.bf16.msra.mxu0 0
        %1332 = vmatprep.subr.bf16.mxu0 0
        %1333 = vmatpush1.bf16.msra.mxu0 0
        %1334 = vmatprep.subr.bf16.mxu0 0
        %1335 = vmatpush1.bf16.msra.mxu0 0
        %1336 = vmatprep.subr.bf16.mxu0 0
        %1337 = vmatpush1.bf16.msra.mxu0 0
        %1338 = vmatprep.subr.bf16.mxu0 0
        %1339 = vmatpush1.bf16.msra.mxu0 0
        %1340 = vmatprep.mubr.bf16.mxu0 0
        %1341 = vmatmul.mubr.bf16.gmra.mrb[0].mxu0 %v1263
        %v1342 = vpop.f32.mrb[0].mxu0
        %v1343 = vadd.f32 %v1300, %v1342
        %v1344 = vpop.f32.mrb[0].mxu0
        %v1345 = vadd.f32 %v1302, %v1344
        %v1346 = vpop.f32.mrb[0].mxu0
        %v1347 = vadd.f32 %v1304, %v1346
        %v1348 = vpop.f32.mrb[0].mxu0
        %v1349 = vadd.f32 %v1306, %v1348
        %1350 = vdwg.mxu0
        %v1351 = vadd.f32 %v979, %v1343
        %v1352 = vadd.f32 %v981, %v1345
        %v1353 = vadd.f32 %v983, %v1347
        %v1354 = vadd.f32 %v985, %v1349
        %s1355 = scalar_lea.vmem [#allocation2], 960
        %v1356 = vld [vmem:[%s1355] sm:$0xff]
        %v1357 = vld [vmem:[%s1355 + $0x8] sm:$0xff]
        %v1358 = vld [vmem:[%s1355 + $0x10] sm:$0xff]
        %v1359 = vld [vmem:[%s1355 + $0x18] sm:$0xff]
        %v1360 = vld [vmem:[%s1355 + $0x20] sm:$0xff]
        %v1361 = vld [vmem:[%s1355 + $0x28] sm:$0xff]
        %v1362 = vld [vmem:[%s1355 + $0x30] sm:$0xff]
        %v1363 = vld [vmem:[%s1355 + $0x38] sm:$0xff]
        %v1364 = vld [vmem:[%s1355 + $0x40] sm:$0xff]
        %v1365 = vld [vmem:[%s1355 + $0x48] sm:$0xff]
        %v1366 = vld [vmem:[%s1355 + $0x50] sm:$0xff]
        %v1367 = vld [vmem:[%s1355 + $0x58] sm:$0xff]
        %v1368 = vld [vmem:[%s1355 + $0x60] sm:$0xff]
        %v1369 = vld [vmem:[%s1355 + $0x68] sm:$0xff]
        %v1370 = vld [vmem:[%s1355 + $0x70] sm:$0xff]
        %v1371 = vld [vmem:[%s1355 + $0x78] sm:$0xff]
        %v1372 = vld [vmem:[%s1355 + $0x80] sm:$0xff]
        %v1373 = vld [vmem:[%s1355 + $0x88] sm:$0xff]
        %v1374 = vld [vmem:[%s1355 + $0x90] sm:$0xff]
        %v1375 = vld [vmem:[%s1355 + $0x98] sm:$0xff]
        %v1376 = vld [vmem:[%s1355 + $0xa0] sm:$0xff]
        %v1377 = vld [vmem:[%s1355 + $0xa8] sm:$0xff]
        %v1378 = vld [vmem:[%s1355 + $0xb0] sm:$0xff]
        %v1379 = vld [vmem:[%s1355 + $0xb8] sm:$0xff]
        %v1380 = vld [vmem:[%s1355 + $0xc0] sm:$0xff]
        %v1381 = vld [vmem:[%s1355 + $0xc8] sm:$0xff]
        %v1382 = vld [vmem:[%s1355 + $0xd0] sm:$0xff]
        %v1383 = vld [vmem:[%s1355 + $0xd8] sm:$0xff]
        %v1384 = vld [vmem:[%s1355 + $0xe0] sm:$0xff]
        %v1385 = vld [vmem:[%s1355 + $0xe8] sm:$0xff]
        %v1386 = vld [vmem:[%s1355 + $0xf0] sm:$0xff]
        %v1387 = vld [vmem:[%s1355 + $0xf8] sm:$0xff]
        %v1388 = vld [vmem:[%s1355 + $0x100] sm:$0xff]
        %v1389 = vld [vmem:[%s1355 + $0x108] sm:$0xff]
        %v1390 = vld [vmem:[%s1355 + $0x110] sm:$0xff]
        %v1391 = vld [vmem:[%s1355 + $0x118] sm:$0xff]
        %v1392 = vld [vmem:[%s1355 + $0x120] sm:$0xff]
        %v1393 = vld [vmem:[%s1355 + $0x128] sm:$0xff]
        %v1394 = vld [vmem:[%s1355 + $0x130] sm:$0xff]
        %v1395 = vld [vmem:[%s1355 + $0x138] sm:$0xff]
        %v1398 = vunpack.c.l.b16 %v234
        %v1399 = vunpack.c.h.b16 %v234
        %v1400 = vunpack.c.l.b16 %v235
        %v1401 = vpack.c.b16 %v1398, %v690
        %v1402 = vpack.c.b16 %v1399, %v691
        %v1403 = vpack.c.b16 %v1400, %v692
        %v1446 = vunpack.c.l.b16 %v1356
        %v1447 = vunpack.c.h.b16 %v1356
        %v1448 = vunpack.c.l.b16 %v1357
        %v1449 = vunpack.c.h.b16 %v1357
        %v1450 = vunpack.c.l.b16 %v1358
        %v1451 = vunpack.c.h.b16 %v1358
        %v1452 = vunpack.c.l.b16 %v1359
        %v1453 = vunpack.c.h.b16 %v1359
        %v1454 = vunpack.c.l.b16 %v1360
        %v1455 = vunpack.c.h.b16 %v1360
        %v1456 = vunpack.c.l.b16 %v1361
        %v1457 = vunpack.c.h.b16 %v1361
        %v1458 = vunpack.c.l.b16 %v1362
        %v1459 = vunpack.c.h.b16 %v1362
        %v1460 = vunpack.c.l.b16 %v1363
        %v1461 = vunpack.c.h.b16 %v1363
        %v1462 = vunpack.c.l.b16 %v1364
        %v1463 = vunpack.c.h.b16 %v1364
        %v1464 = vunpack.c.l.b16 %v1365
        %v1465 = vunpack.c.h.b16 %v1365
        %v1466 = vunpack.c.l.b16 %v1366
        %v1467 = vunpack.c.h.b16 %v1366
        %v1468 = vunpack.c.l.b16 %v1367
        %v1469 = vunpack.c.h.b16 %v1367
        %v1470 = vunpack.c.l.b16 %v1368
        %v1471 = vunpack.c.h.b16 %v1368
        %v1472 = vunpack.c.l.b16 %v1369
        %v1473 = vunpack.c.h.b16 %v1369
        %v1474 = vunpack.c.l.b16 %v1370
        %v1475 = vunpack.c.h.b16 %v1370
        %v1476 = vunpack.c.l.b16 %v1371
        %v1477 = vunpack.c.h.b16 %v1371
        %v1478 = vunpack.c.l.b16 %v1372
        %v1479 = vunpack.c.h.b16 %v1372
        %v1480 = vunpack.c.l.b16 %v1373
        %v1481 = vunpack.c.h.b16 %v1373
        %v1482 = vunpack.c.l.b16 %v1374
        %v1483 = vunpack.c.h.b16 %v1374
        %v1484 = vunpack.c.l.b16 %v1375
        %v1485 = vunpack.c.h.b16 %v1375
        %v1486 = vunpack.c.l.b16 %v1376
        %v1487 = vunpack.c.h.b16 %v1376
        %v1488 = vunpack.c.l.b16 %v1377
        %v1489 = vunpack.c.h.b16 %v1377
        %v1490 = vunpack.c.l.b16 %v1378
        %v1491 = vunpack.c.h.b16 %v1378
        %v1492 = vunpack.c.l.b16 %v1379
        %v1493 = vunpack.c.h.b16 %v1379
        %v1494 = vunpack.c.l.b16 %v1380
        %v1495 = vunpack.c.h.b16 %v1380
        %v1496 = vunpack.c.l.b16 %v1381
        %v1497 = vunpack.c.h.b16 %v1381
        %v1498 = vunpack.c.l.b16 %v1382
        %v1499 = vunpack.c.h.b16 %v1382
        %v1500 = vunpack.c.l.b16 %v1383
        %v1501 = vunpack.c.h.b16 %v1383
        %v1502 = vunpack.c.l.b16 %v1384
        %v1503 = vunpack.c.h.b16 %v1384
        %v1504 = vunpack.c.l.b16 %v1385
        %v1505 = vunpack.c.h.b16 %v1385
        %v1506 = vunpack.c.l.b16 %v1386
        %v1507 = vunpack.c.h.b16 %v1386
        %v1508 = vunpack.c.l.b16 %v1387
        %v1509 = vunpack.c.h.b16 %v1387
        %v1510 = vunpack.c.l.b16 %v1388
        %v1511 = vunpack.c.h.b16 %v1388
        %v1512 = vunpack.c.l.b16 %v1389
        %v1513 = vunpack.c.h.b16 %v1389
        %v1514 = vunpack.c.l.b16 %v1390
        %v1515 = vunpack.c.h.b16 %v1390
        %v1516 = vunpack.c.l.b16 %v1391
        %v1517 = vunpack.c.h.b16 %v1391
        %v1518 = vunpack.c.l.b16 %v1392
        %v1519 = vunpack.c.h.b16 %v1392
        %v1520 = vunpack.c.l.b16 %v1393
        %v1521 = vunpack.c.h.b16 %v1393
        %v1522 = vunpack.c.l.b16 %v1394
        %v1523 = vunpack.c.h.b16 %v1394
        %v1524 = vunpack.c.l.b16 %v1395
        %v1525 = vunpack.c.h.b16 %v1395
        %v1526 = vpack.c.b16 %v1448, %v1446
        %v1527 = vpack.c.b16 %v1449, %v1447
        %v1528 = vpack.c.b16 %v1452, %v1450
        %v1529 = vpack.c.b16 %v1453, %v1451
        %v1530 = vpack.c.b16 %v1456, %v1454
        %v1531 = vpack.c.b16 %v1457, %v1455
        %v1532 = vpack.c.b16 %v1460, %v1458
        %v1533 = vpack.c.b16 %v1461, %v1459
        %v1534 = vpack.c.b16 %v1464, %v1462
        %v1535 = vpack.c.b16 %v1465, %v1463
        %v1536 = vpack.c.b16 %v1468, %v1466
        %v1537 = vpack.c.b16 %v1469, %v1467
        %v1538 = vpack.c.b16 %v1472, %v1470
        %v1539 = vpack.c.b16 %v1473, %v1471
        %v1540 = vpack.c.b16 %v1476, %v1474
        %v1541 = vpack.c.b16 %v1477, %v1475
        %v1542 = vpack.c.b16 %v1480, %v1478
        %v1543 = vpack.c.b16 %v1481, %v1479
        %v1544 = vpack.c.b16 %v1484, %v1482
        %v1545 = vpack.c.b16 %v1485, %v1483
        %v1546 = vpack.c.b16 %v1488, %v1486
        %v1547 = vpack.c.b16 %v1489, %v1487
        %v1548 = vpack.c.b16 %v1492, %v1490
        %v1549 = vpack.c.b16 %v1493, %v1491
        %v1550 = vpack.c.b16 %v1496, %v1494
        %v1551 = vpack.c.b16 %v1497, %v1495
        %v1552 = vpack.c.b16 %v1500, %v1498
        %v1553 = vpack.c.b16 %v1501, %v1499
        %v1554 = vpack.c.b16 %v1504, %v1502
        %v1555 = vpack.c.b16 %v1505, %v1503
        %v1556 = vpack.c.b16 %v1508, %v1506
        %v1557 = vpack.c.b16 %v1509, %v1507
        %v1558 = vpack.c.b16 %v1512, %v1510
        %v1559 = vpack.c.b16 %v1513, %v1511
        %v1560 = vpack.c.b16 %v1516, %v1514
        %v1561 = vpack.c.b16 %v1517, %v1515
        %v1562 = vpack.c.b16 %v1520, %v1518
        %v1563 = vpack.c.b16 %v1521, %v1519
        %v1564 = vpack.c.b16 %v1524, %v1522
        %v1565 = vpack.c.b16 %v1525, %v1523
        %v1607 = vsel %vm593, %v1403, 0
        %1609 = vmatprep.subr.bf16.mxu0 %v1527
        %1610 = vmatpush1.bf16.msra.mxu0 %v1526
        %1611 = vmatprep.subr.bf16.mxu0 %v1529
        %1612 = vmatpush1.bf16.msra.mxu0 %v1528
        %1613 = vmatprep.subr.bf16.mxu0 %v1531
        %1614 = vmatpush1.bf16.msra.mxu0 %v1530
        %1615 = vmatprep.subr.bf16.mxu0 %v1533
        %1616 = vmatpush1.bf16.msra.mxu0 %v1532
        %1617 = vmatprep.subr.bf16.mxu0 %v1535
        %1618 = vmatpush1.bf16.msra.mxu0 %v1534
        %1619 = vmatprep.subr.bf16.mxu0 %v1537
        %1620 = vmatpush1.bf16.msra.mxu0 %v1536
        %1621 = vmatprep.subr.bf16.mxu0 %v1539
        %1622 = vmatpush1.bf16.msra.mxu0 %v1538
        %1623 = vmatprep.subr.bf16.mxu0 %v1541
        %1624 = vmatpush1.bf16.msra.mxu0 %v1540
        %1625 = vmatprep.subr.bf16.mxu0 %v1543
        %1626 = vmatpush1.bf16.msra.mxu0 %v1542
        %1627 = vmatprep.subr.bf16.mxu0 %v1545
        %1628 = vmatpush1.bf16.msra.mxu0 %v1544
        %1629 = vmatprep.subr.bf16.mxu0 %v1547
        %1630 = vmatpush1.bf16.msra.mxu0 %v1546
        %1631 = vmatprep.subr.bf16.mxu0 %v1549
        %1632 = vmatpush1.bf16.msra.mxu0 %v1548
        %1633 = vmatprep.subr.bf16.mxu0 %v1551
        %1634 = vmatpush1.bf16.msra.mxu0 %v1550
        %1635 = vmatprep.subr.bf16.mxu0 %v1553
        %1636 = vmatpush1.bf16.msra.mxu0 %v1552
        %1637 = vmatprep.subr.bf16.mxu0 %v1555
        %1638 = vmatpush1.bf16.msra.mxu0 %v1554
        %1639 = vmatprep.subr.bf16.mxu0 %v1557
        %1640 = vmatpush1.bf16.msra.mxu0 %v1556
        %1641 = vmatprep.mubr.bf16.mxu0 %v1402
        %1642 = vmatmul.mubr.bf16.gmra.mrb[0].mxu0 %v1401
        %v1643 = vpop.f32.mrb[0].mxu0
        %v1644 = vadd.f32 0.0, %v1643
        %v1645 = vpop.f32.mrb[0].mxu0
        %v1646 = vadd.f32 0.0, %v1645
        %v1647 = vpop.f32.mrb[0].mxu0
        %v1648 = vadd.f32 0.0, %v1647
        %v1649 = vpop.f32.mrb[0].mxu0
        %v1650 = vadd.f32 0.0, %v1649
        %1651 = vdwg.mxu0
        %1652 = vmatprep.subr.bf16.mxu0 %v1559
        %1653 = vmatpush1.bf16.msra.mxu0 %v1558
        %1654 = vmatprep.subr.bf16.mxu0 %v1561
        %1655 = vmatpush1.bf16.msra.mxu0 %v1560
        %1656 = vmatprep.subr.bf16.mxu0 %v1563
        %1657 = vmatpush1.bf16.msra.mxu0 %v1562
        %1658 = vmatprep.subr.bf16.mxu0 %v1565
        %1659 = vmatpush1.bf16.msra.mxu0 %v1564
        %1660 = vmatprep.subr.bf16.mxu0 0
        %1661 = vmatpush1.bf16.msra.mxu0 0
        %1662 = vmatprep.subr.bf16.mxu0 0
        %1663 = vmatpush1.bf16.msra.mxu0 0
        %1664 = vmatprep.subr.bf16.mxu0 0
        %1665 = vmatpush1.bf16.msra.mxu0 0
        %1666 = vmatprep.subr.bf16.mxu0 0
        %1667 = vmatpush1.bf16.msra.mxu0 0
        %1668 = vmatprep.subr.bf16.mxu0 0
        %1669 = vmatpush1.bf16.msra.mxu0 0
        %1670 = vmatprep.subr.bf16.mxu0 0
        %1671 = vmatpush1.bf16.msra.mxu0 0
        %1672 = vmatprep.subr.bf16.mxu0 0
        %1673 = vmatpush1.bf16.msra.mxu0 0
        %1674 = vmatprep.subr.bf16.mxu0 0
        %1675 = vmatpush1.bf16.msra.mxu0 0
        %1676 = vmatprep.subr.bf16.mxu0 0
        %1677 = vmatpush1.bf16.msra.mxu0 0
        %1678 = vmatprep.subr.bf16.mxu0 0
        %1679 = vmatpush1.bf16.msra.mxu0 0
        %1680 = vmatprep.subr.bf16.mxu0 0
        %1681 = vmatpush1.bf16.msra.mxu0 0
        %1682 = vmatprep.subr.bf16.mxu0 0
        %1683 = vmatpush1.bf16.msra.mxu0 0
        %1684 = vmatprep.mubr.bf16.mxu0 0
        %1685 = vmatmul.mubr.bf16.gmra.mrb[0].mxu0 %v1607
        %v1686 = vpop.f32.mrb[0].mxu0
        %v1687 = vadd.f32 %v1644, %v1686
        %v1688 = vpop.f32.mrb[0].mxu0
        %v1689 = vadd.f32 %v1646, %v1688
        %v1690 = vpop.f32.mrb[0].mxu0
        %v1691 = vadd.f32 %v1648, %v1690
        %v1692 = vpop.f32.mrb[0].mxu0
        %v1693 = vadd.f32 %v1650, %v1692
        %1694 = vdwg.mxu0
        %v1695 = vadd.f32 %v1351, %v1687
        %v1696 = vadd.f32 %v1352, %v1689
        %v1697 = vadd.f32 %v1353, %v1691
        %v1698 = vadd.f32 %v1354, %v1693
        %v1700 = vshrl.u32 %v234, 16
        %v1702 = vrot.slane %v1700, 4
        %v1703 = vshll.u32 %v234, 16
        %v1705 = vrot.slane %v1703, 5
        %v1706 = vor.u32 %v1702, %v1705
        %v1707 = vrot.slane %v1706, 4
        %v1709 = vshll.u32 %v236, 16
        %v1711 = vrot.slane %v1709, 5
        %v1712 = vsel %vm284, %v1707, %v1711
        %v1714 = vshrl.u32 %v235, 16
        %v1716 = vrot.slane %v1714, 4
        %v1717 = vshll.u32 %v235, 16
        %v1719 = vrot.slane %v1717, 5
        %v1720 = vor.u32 %v1716, %v1719
        %v1721 = vrot.slane %v1720, 4
        %v1723 = vshll.u32 %v237, 16
        %v1725 = vrot.slane %v1723, 5
        %v1726 = vsel %vm284, %v1721, %v1725
        %s1727 = scalar_lea.vmem [#allocation2], 1280
        %v1728 = vld [vmem:[%s1727] sm:$0xff]
        %v1729 = vld [vmem:[%s1727 + $0x8] sm:$0xff]
        %v1730 = vld [vmem:[%s1727 + $0x10] sm:$0xff]
        %v1731 = vld [vmem:[%s1727 + $0x18] sm:$0xff]
        %v1732 = vld [vmem:[%s1727 + $0x20] sm:$0xff]
        %v1733 = vld [vmem:[%s1727 + $0x28] sm:$0xff]
        %v1734 = vld [vmem:[%s1727 + $0x30] sm:$0xff]
        %v1735 = vld [vmem:[%s1727 + $0x38] sm:$0xff]
        %v1736 = vld [vmem:[%s1727 + $0x40] sm:$0xff]
        %v1737 = vld [vmem:[%s1727 + $0x48] sm:$0xff]
        %v1738 = vld [vmem:[%s1727 + $0x50] sm:$0xff]
        %v1739 = vld [vmem:[%s1727 + $0x58] sm:$0xff]
        %v1740 = vld [vmem:[%s1727 + $0x60] sm:$0xff]
        %v1741 = vld [vmem:[%s1727 + $0x68] sm:$0xff]
        %v1742 = vld [vmem:[%s1727 + $0x70] sm:$0xff]
        %v1743 = vld [vmem:[%s1727 + $0x78] sm:$0xff]
        %v1744 = vld [vmem:[%s1727 + $0x80] sm:$0xff]
        %v1745 = vld [vmem:[%s1727 + $0x88] sm:$0xff]
        %v1746 = vld [vmem:[%s1727 + $0x90] sm:$0xff]
        %v1747 = vld [vmem:[%s1727 + $0x98] sm:$0xff]
        %v1748 = vld [vmem:[%s1727 + $0xa0] sm:$0xff]
        %v1749 = vld [vmem:[%s1727 + $0xa8] sm:$0xff]
        %v1750 = vld [vmem:[%s1727 + $0xb0] sm:$0xff]
        %v1751 = vld [vmem:[%s1727 + $0xb8] sm:$0xff]
        %v1752 = vld [vmem:[%s1727 + $0xc0] sm:$0xff]
        %v1753 = vld [vmem:[%s1727 + $0xc8] sm:$0xff]
        %v1754 = vld [vmem:[%s1727 + $0xd0] sm:$0xff]
        %v1755 = vld [vmem:[%s1727 + $0xd8] sm:$0xff]
        %v1756 = vld [vmem:[%s1727 + $0xe0] sm:$0xff]
        %v1757 = vld [vmem:[%s1727 + $0xe8] sm:$0xff]
        %v1758 = vld [vmem:[%s1727 + $0xf0] sm:$0xff]
        %v1759 = vld [vmem:[%s1727 + $0xf8] sm:$0xff]
        %v1760 = vld [vmem:[%s1727 + $0x100] sm:$0xff]
        %v1761 = vld [vmem:[%s1727 + $0x108] sm:$0xff]
        %v1762 = vld [vmem:[%s1727 + $0x110] sm:$0xff]
        %v1763 = vld [vmem:[%s1727 + $0x118] sm:$0xff]
        %v1764 = vld [vmem:[%s1727 + $0x120] sm:$0xff]
        %v1765 = vld [vmem:[%s1727 + $0x128] sm:$0xff]
        %v1766 = vld [vmem:[%s1727 + $0x130] sm:$0xff]
        %v1767 = vld [vmem:[%s1727 + $0x138] sm:$0xff]
        %v1768 = vunpack.c.l.b16 %v1712
        %v1769 = vunpack.c.h.b16 %v1712
        %v1770 = vunpack.c.l.b16 %v1726
        %v1771 = vpack.c.b16 %v1768, %v385
        %v1772 = vpack.c.b16 %v1769, %v386
        %v1773 = vpack.c.b16 %v1770, %v387
        %v1816 = vunpack.c.l.b16 %v1728
        %v1817 = vunpack.c.h.b16 %v1728
        %v1818 = vunpack.c.l.b16 %v1729
        %v1819 = vunpack.c.h.b16 %v1729
        %v1820 = vunpack.c.l.b16 %v1730
        %v1821 = vunpack.c.h.b16 %v1730
        %v1822 = vunpack.c.l.b16 %v1731
        %v1823 = vunpack.c.h.b16 %v1731
        %v1824 = vunpack.c.l.b16 %v1732
        %v1825 = vunpack.c.h.b16 %v1732
        %v1826 = vunpack.c.l.b16 %v1733
        %v1827 = vunpack.c.h.b16 %v1733
        %v1828 = vunpack.c.l.b16 %v1734
        %v1829 = vunpack.c.h.b16 %v1734
        %v1830 = vunpack.c.l.b16 %v1735
        %v1831 = vunpack.c.h.b16 %v1735
        %v1832 = vunpack.c.l.b16 %v1736
        %v1833 = vunpack.c.h.b16 %v1736
        %v1834 = vunpack.c.l.b16 %v1737
        %v1835 = vunpack.c.h.b16 %v1737
        %v1836 = vunpack.c.l.b16 %v1738
        %v1837 = vunpack.c.h.b16 %v1738
        %v1838 = vunpack.c.l.b16 %v1739
        %v1839 = vunpack.c.h.b16 %v1739
        %v1840 = vunpack.c.l.b16 %v1740
        %v1841 = vunpack.c.h.b16 %v1740
        %v1842 = vunpack.c.l.b16 %v1741
        %v1843 = vunpack.c.h.b16 %v1741
        %v1844 = vunpack.c.l.b16 %v1742
        %v1845 = vunpack.c.h.b16 %v1742
        %v1846 = vunpack.c.l.b16 %v1743
        %v1847 = vunpack.c.h.b16 %v1743
        %v1848 = vunpack.c.l.b16 %v1744
        %v1849 = vunpack.c.h.b16 %v1744
        %v1850 = vunpack.c.l.b16 %v1745
        %v1851 = vunpack.c.h.b16 %v1745
        %v1852 = vunpack.c.l.b16 %v1746
        %v1853 = vunpack.c.h.b16 %v1746
        %v1854 = vunpack.c.l.b16 %v1747
        %v1855 = vunpack.c.h.b16 %v1747
        %v1856 = vunpack.c.l.b16 %v1748
        %v1857 = vunpack.c.h.b16 %v1748
        %v1858 = vunpack.c.l.b16 %v1749
        %v1859 = vunpack.c.h.b16 %v1749
        %v1860 = vunpack.c.l.b16 %v1750
        %v1861 = vunpack.c.h.b16 %v1750
        %v1862 = vunpack.c.l.b16 %v1751
        %v1863 = vunpack.c.h.b16 %v1751
        %v1864 = vunpack.c.l.b16 %v1752
        %v1865 = vunpack.c.h.b16 %v1752
        %v1866 = vunpack.c.l.b16 %v1753
        %v1867 = vunpack.c.h.b16 %v1753
        %v1868 = vunpack.c.l.b16 %v1754
        %v1869 = vunpack.c.h.b16 %v1754
        %v1870 = vunpack.c.l.b16 %v1755
        %v1871 = vunpack.c.h.b16 %v1755
        %v1872 = vunpack.c.l.b16 %v1756
        %v1873 = vunpack.c.h.b16 %v1756
        %v1874 = vunpack.c.l.b16 %v1757
        %v1875 = vunpack.c.h.b16 %v1757
        %v1876 = vunpack.c.l.b16 %v1758
        %v1877 = vunpack.c.h.b16 %v1758
        %v1878 = vunpack.c.l.b16 %v1759
        %v1879 = vunpack.c.h.b16 %v1759
        %v1880 = vunpack.c.l.b16 %v1760
        %v1881 = vunpack.c.h.b16 %v1760
        %v1882 = vunpack.c.l.b16 %v1761
        %v1883 = vunpack.c.h.b16 %v1761
        %v1884 = vunpack.c.l.b16 %v1762
        %v1885 = vunpack.c.h.b16 %v1762
        %v1886 = vunpack.c.l.b16 %v1763
        %v1887 = vunpack.c.h.b16 %v1763
        %v1888 = vunpack.c.l.b16 %v1764
        %v1889 = vunpack.c.h.b16 %v1764
        %v1890 = vunpack.c.l.b16 %v1765
        %v1891 = vunpack.c.h.b16 %v1765
        %v1892 = vunpack.c.l.b16 %v1766
        %v1893 = vunpack.c.h.b16 %v1766
        %v1894 = vunpack.c.l.b16 %v1767
        %v1895 = vunpack.c.h.b16 %v1767
        %v1896 = vpack.c.b16 %v1818, %v1816
        %v1897 = vpack.c.b16 %v1819, %v1817
        %v1898 = vpack.c.b16 %v1822, %v1820
        %v1899 = vpack.c.b16 %v1823, %v1821
        %v1900 = vpack.c.b16 %v1826, %v1824
        %v1901 = vpack.c.b16 %v1827, %v1825
        %v1902 = vpack.c.b16 %v1830, %v1828
        %v1903 = vpack.c.b16 %v1831, %v1829
        %v1904 = vpack.c.b16 %v1834, %v1832
        %v1905 = vpack.c.b16 %v1835, %v1833
        %v1906 = vpack.c.b16 %v1838, %v1836
        %v1907 = vpack.c.b16 %v1839, %v1837
        %v1908 = vpack.c.b16 %v1842, %v1840
        %v1909 = vpack.c.b16 %v1843, %v1841
        %v1910 = vpack.c.b16 %v1846, %v1844
        %v1911 = vpack.c.b16 %v1847, %v1845
        %v1912 = vpack.c.b16 %v1850, %v1848
        %v1913 = vpack.c.b16 %v1851, %v1849
        %v1914 = vpack.c.b16 %v1854, %v1852
        %v1915 = vpack.c.b16 %v1855, %v1853
        %v1916 = vpack.c.b16 %v1858, %v1856
        %v1917 = vpack.c.b16 %v1859, %v1857
        %v1918 = vpack.c.b16 %v1862, %v1860
        %v1919 = vpack.c.b16 %v1863, %v1861
        %v1920 = vpack.c.b16 %v1866, %v1864
        %v1921 = vpack.c.b16 %v1867, %v1865
        %v1922 = vpack.c.b16 %v1870, %v1868
        %v1923 = vpack.c.b16 %v1871, %v1869
        %v1924 = vpack.c.b16 %v1874, %v1872
        %v1925 = vpack.c.b16 %v1875, %v1873
        %v1926 = vpack.c.b16 %v1878, %v1876
        %v1927 = vpack.c.b16 %v1879, %v1877
        %v1928 = vpack.c.b16 %v1882, %v1880
        %v1929 = vpack.c.b16 %v1883, %v1881
        %v1930 = vpack.c.b16 %v1886, %v1884
        %v1931 = vpack.c.b16 %v1887, %v1885
        %v1932 = vpack.c.b16 %v1890, %v1888
        %v1933 = vpack.c.b16 %v1891, %v1889
        %v1934 = vpack.c.b16 %v1894, %v1892
        %v1935 = vpack.c.b16 %v1895, %v1893
        %v1977 = vsel %vm593, %v1773, 0
        %1979 = vmatprep.subr.bf16.mxu0 %v1897
        %1980 = vmatpush1.bf16.msra.mxu0 %v1896
        %1981 = vmatprep.subr.bf16.mxu0 %v1899
        %1982 = vmatpush1.bf16.msra.mxu0 %v1898
        %1983 = vmatprep.subr.bf16.mxu0 %v1901
        %1984 = vmatpush1.bf16.msra.mxu0 %v1900
        %1985 = vmatprep.subr.bf16.mxu0 %v1903
        %1986 = vmatpush1.bf16.msra.mxu0 %v1902
        %1987 = vmatprep.subr.bf16.mxu0 %v1905
        %1988 = vmatpush1.bf16.msra.mxu0 %v1904
        %1989 = vmatprep.subr.bf16.mxu0 %v1907
        %1990 = vmatpush1.bf16.msra.mxu0 %v1906
        %1991 = vmatprep.subr.bf16.mxu0 %v1909
        %1992 = vmatpush1.bf16.msra.mxu0 %v1908
        %1993 = vmatprep.subr.bf16.mxu0 %v1911
        %1994 = vmatpush1.bf16.msra.mxu0 %v1910
        %1995 = vmatprep.subr.bf16.mxu0 %v1913
        %1996 = vmatpush1.bf16.msra.mxu0 %v1912
        %1997 = vmatprep.subr.bf16.mxu0 %v1915
        %1998 = vmatpush1.bf16.msra.mxu0 %v1914
        %1999 = vmatprep.subr.bf16.mxu0 %v1917
        %2000 = vmatpush1.bf16.msra.mxu0 %v1916
        %2001 = vmatprep.subr.bf16.mxu0 %v1919
        %2002 = vmatpush1.bf16.msra.mxu0 %v1918
        %2003 = vmatprep.subr.bf16.mxu0 %v1921
        %2004 = vmatpush1.bf16.msra.mxu0 %v1920
        %2005 = vmatprep.subr.bf16.mxu0 %v1923
        %2006 = vmatpush1.bf16.msra.mxu0 %v1922
        %2007 = vmatprep.subr.bf16.mxu0 %v1925
        %2008 = vmatpush1.bf16.msra.mxu0 %v1924
        %2009 = vmatprep.subr.bf16.mxu0 %v1927
        %2010 = vmatpush1.bf16.msra.mxu0 %v1926
        %2011 = vmatprep.mubr.bf16.mxu0 %v1772
        %2012 = vmatmul.mubr.bf16.gmra.mrb[0].mxu0 %v1771
        %v2013 = vpop.f32.mrb[0].mxu0
        %v2014 = vadd.f32 0.0, %v2013
        %v2015 = vpop.f32.mrb[0].mxu0
        %v2016 = vadd.f32 0.0, %v2015
        %v2017 = vpop.f32.mrb[0].mxu0
        %v2018 = vadd.f32 0.0, %v2017
        %v2019 = vpop.f32.mrb[0].mxu0
        %v2020 = vadd.f32 0.0, %v2019
        %2021 = vdwg.mxu0
        %2022 = vmatprep.subr.bf16.mxu0 %v1929
        %2023 = vmatpush1.bf16.msra.mxu0 %v1928
        %2024 = vmatprep.subr.bf16.mxu0 %v1931
        %2025 = vmatpush1.bf16.msra.mxu0 %v1930
        %2026 = vmatprep.subr.bf16.mxu0 %v1933
        %2027 = vmatpush1.bf16.msra.mxu0 %v1932
        %2028 = vmatprep.subr.bf16.mxu0 %v1935
        %2029 = vmatpush1.bf16.msra.mxu0 %v1934
        %2030 = vmatprep.subr.bf16.mxu0 0
        %2031 = vmatpush1.bf16.msra.mxu0 0
        %2032 = vmatprep.subr.bf16.mxu0 0
        %2033 = vmatpush1.bf16.msra.mxu0 0
        %2034 = vmatprep.subr.bf16.mxu0 0
        %2035 = vmatpush1.bf16.msra.mxu0 0
        %2036 = vmatprep.subr.bf16.mxu0 0
        %2037 = vmatpush1.bf16.msra.mxu0 0
        %2038 = vmatprep.subr.bf16.mxu0 0
        %2039 = vmatpush1.bf16.msra.mxu0 0
        %2040 = vmatprep.subr.bf16.mxu0 0
        %2041 = vmatpush1.bf16.msra.mxu0 0
        %2042 = vmatprep.subr.bf16.mxu0 0
        %2043 = vmatpush1.bf16.msra.mxu0 0
        %2044 = vmatprep.subr.bf16.mxu0 0
        %2045 = vmatpush1.bf16.msra.mxu0 0
        %2046 = vmatprep.subr.bf16.mxu0 0
        %2047 = vmatpush1.bf16.msra.mxu0 0
        %2048 = vmatprep.subr.bf16.mxu0 0
        %2049 = vmatpush1.bf16.msra.mxu0 0
        %2050 = vmatprep.subr.bf16.mxu0 0
        %2051 = vmatpush1.bf16.msra.mxu0 0
        %2052 = vmatprep.subr.bf16.mxu0 0
        %2053 = vmatpush1.bf16.msra.mxu0 0
        %2054 = vmatprep.mubr.bf16.mxu0 0
        %2055 = vmatmul.mubr.bf16.gmra.mrb[0].mxu0 %v1977
        %v2056 = vpop.f32.mrb[0].mxu0
        %v2057 = vadd.f32 %v2014, %v2056
        %v2058 = vpop.f32.mrb[0].mxu0
        %v2059 = vadd.f32 %v2016, %v2058
        %v2060 = vpop.f32.mrb[0].mxu0
        %v2061 = vadd.f32 %v2018, %v2060
        %v2062 = vpop.f32.mrb[0].mxu0
        %v2063 = vadd.f32 %v2020, %v2062
        %2064 = vdwg.mxu0
        %v2065 = vadd.f32 %v1695, %v2057
        %v2066 = vadd.f32 %v1696, %v2059
        %v2067 = vadd.f32 %v1697, %v2061
        %v2068 = vadd.f32 %v1698, %v2063
        %v2071 = vrot.slane %v234, 5
        %v2072 = vrot.slane %v2071, 4
        %v2073 = vrot.slane %v236, 5
        %v2074 = vsel %vm993, %v2072, %v2073
        %v2075 = vrot.slane %v235, 5
        %v2076 = vrot.slane %v2075, 4
        %v2077 = vrot.slane %v237, 5
        %v2078 = vsel %vm993, %v2076, %v2077
        %s2079 = scalar_lea.vmem [#allocation2], 1600
        %v2080 = vld [vmem:[%s2079] sm:$0xff]
        %v2081 = vld [vmem:[%s2079 + $0x8] sm:$0xff]
        %v2082 = vld [vmem:[%s2079 + $0x10] sm:$0xff]
        %v2083 = vld [vmem:[%s2079 + $0x18] sm:$0xff]
        %v2084 = vld [vmem:[%s2079 + $0x20] sm:$0xff]
        %v2085 = vld [vmem:[%s2079 + $0x28] sm:$0xff]
        %v2086 = vld [vmem:[%s2079 + $0x30] sm:$0xff]
        %v2087 = vld [vmem:[%s2079 + $0x38] sm:$0xff]
        %v2088 = vld [vmem:[%s2079 + $0x40] sm:$0xff]
        %v2089 = vld [vmem:[%s2079 + $0x48] sm:$0xff]
        %v2090 = vld [vmem:[%s2079 + $0x50] sm:$0xff]
        %v2091 = vld [vmem:[%s2079 + $0x58] sm:$0xff]
        %v2092 = vld [vmem:[%s2079 + $0x60] sm:$0xff]
        %v2093 = vld [vmem:[%s2079 + $0x68] sm:$0xff]
        %v2094 = vld [vmem:[%s2079 + $0x70] sm:$0xff]
        %v2095 = vld [vmem:[%s2079 + $0x78] sm:$0xff]
        %v2096 = vld [vmem:[%s2079 + $0x80] sm:$0xff]
        %v2097 = vld [vmem:[%s2079 + $0x88] sm:$0xff]
        %v2098 = vld [vmem:[%s2079 + $0x90] sm:$0xff]
        %v2099 = vld [vmem:[%s2079 + $0x98] sm:$0xff]
        %v2100 = vld [vmem:[%s2079 + $0xa0] sm:$0xff]
        %v2101 = vld [vmem:[%s2079 + $0xa8] sm:$0xff]
        %v2102 = vld [vmem:[%s2079 + $0xb0] sm:$0xff]
        %v2103 = vld [vmem:[%s2079 + $0xb8] sm:$0xff]
        %v2104 = vld [vmem:[%s2079 + $0xc0] sm:$0xff]
        %v2105 = vld [vmem:[%s2079 + $0xc8] sm:$0xff]
        %v2106 = vld [vmem:[%s2079 + $0xd0] sm:$0xff]
        %v2107 = vld [vmem:[%s2079 + $0xd8] sm:$0xff]
        %v2108 = vld [vmem:[%s2079 + $0xe0] sm:$0xff]
        %v2109 = vld [vmem:[%s2079 + $0xe8] sm:$0xff]
        %v2110 = vld [vmem:[%s2079 + $0xf0] sm:$0xff]
        %v2111 = vld [vmem:[%s2079 + $0xf8] sm:$0xff]
        %v2112 = vld [vmem:[%s2079 + $0x100] sm:$0xff]
        %v2113 = vld [vmem:[%s2079 + $0x108] sm:$0xff]
        %v2114 = vld [vmem:[%s2079 + $0x110] sm:$0xff]
        %v2115 = vld [vmem:[%s2079 + $0x118] sm:$0xff]
        %v2116 = vld [vmem:[%s2079 + $0x120] sm:$0xff]
        %v2117 = vld [vmem:[%s2079 + $0x128] sm:$0xff]
        %v2118 = vld [vmem:[%s2079 + $0x130] sm:$0xff]
        %v2119 = vld [vmem:[%s2079 + $0x138] sm:$0xff]
        %v2120 = vunpack.c.l.b16 %v2074
        %v2121 = vunpack.c.h.b16 %v2074
        %v2122 = vunpack.c.l.b16 %v2078
        %v2123 = vpack.c.b16 %v2120, %v1054
        %v2124 = vpack.c.b16 %v2121, %v1055
        %v2125 = vpack.c.b16 %v2122, %v1056
        %v2168 = vunpack.c.l.b16 %v2080
        %v2169 = vunpack.c.h.b16 %v2080
        %v2170 = vunpack.c.l.b16 %v2081
        %v2171 = vunpack.c.h.b16 %v2081
        %v2172 = vunpack.c.l.b16 %v2082
        %v2173 = vunpack.c.h.b16 %v2082
        %v2174 = vunpack.c.l.b16 %v2083
        %v2175 = vunpack.c.h.b16 %v2083
        %v2176 = vunpack.c.l.b16 %v2084
        %v2177 = vunpack.c.h.b16 %v2084
        %v2178 = vunpack.c.l.b16 %v2085
        %v2179 = vunpack.c.h.b16 %v2085
        %v2180 = vunpack.c.l.b16 %v2086
        %v2181 = vunpack.c.h.b16 %v2086
        %v2182 = vunpack.c.l.b16 %v2087
        %v2183 = vunpack.c.h.b16 %v2087
        %v2184 = vunpack.c.l.b16 %v2088
        %v2185 = vunpack.c.h.b16 %v2088
        %v2186 = vunpack.c.l.b16 %v2089
        %v2187 = vunpack.c.h.b16 %v2089
        %v2188 = vunpack.c.l.b16 %v2090
        %v2189 = vunpack.c.h.b16 %v2090
        %v2190 = vunpack.c.l.b16 %v2091
        %v2191 = vunpack.c.h.b16 %v2091
        %v2192 = vunpack.c.l.b16 %v2092
        %v2193 = vunpack.c.h.b16 %v2092
        %v2194 = vunpack.c.l.b16 %v2093
        %v2195 = vunpack.c.h.b16 %v2093
        %v2196 = vunpack.c.l.b16 %v2094
        %v2197 = vunpack.c.h.b16 %v2094
        %v2198 = vunpack.c.l.b16 %v2095
        %v2199 = vunpack.c.h.b16 %v2095
        %v2200 = vunpack.c.l.b16 %v2096
        %v2201 = vunpack.c.h.b16 %v2096
        %v2202 = vunpack.c.l.b16 %v2097
        %v2203 = vunpack.c.h.b16 %v2097
        %v2204 = vunpack.c.l.b16 %v2098
        %v2205 = vunpack.c.h.b16 %v2098
        %v2206 = vunpack.c.l.b16 %v2099
        %v2207 = vunpack.c.h.b16 %v2099
        %v2208 = vunpack.c.l.b16 %v2100
        %v2209 = vunpack.c.h.b16 %v2100
        %v2210 = vunpack.c.l.b16 %v2101
        %v2211 = vunpack.c.h.b16 %v2101
        %v2212 = vunpack.c.l.b16 %v2102
        %v2213 = vunpack.c.h.b16 %v2102
        %v2214 = vunpack.c.l.b16 %v2103
        %v2215 = vunpack.c.h.b16 %v2103
        %v2216 = vunpack.c.l.b16 %v2104
        %v2217 = vunpack.c.h.b16 %v2104
        %v2218 = vunpack.c.l.b16 %v2105
        %v2219 = vunpack.c.h.b16 %v2105
        %v2220 = vunpack.c.l.b16 %v2106
        %v2221 = vunpack.c.h.b16 %v2106
        %v2222 = vunpack.c.l.b16 %v2107
        %v2223 = vunpack.c.h.b16 %v2107
        %v2224 = vunpack.c.l.b16 %v2108
        %v2225 = vunpack.c.h.b16 %v2108
        %v2226 = vunpack.c.l.b16 %v2109
        %v2227 = vunpack.c.h.b16 %v2109
        %v2228 = vunpack.c.l.b16 %v2110
        %v2229 = vunpack.c.h.b16 %v2110
        %v2230 = vunpack.c.l.b16 %v2111
        %v2231 = vunpack.c.h.b16 %v2111
        %v2232 = vunpack.c.l.b16 %v2112
        %v2233 = vunpack.c.h.b16 %v2112
        %v2234 = vunpack.c.l.b16 %v2113
        %v2235 = vunpack.c.h.b16 %v2113
        %v2236 = vunpack.c.l.b16 %v2114
        %v2237 = vunpack.c.h.b16 %v2114
        %v2238 = vunpack.c.l.b16 %v2115
        %v2239 = vunpack.c.h.b16 %v2115
        %v2240 = vunpack.c.l.b16 %v2116
        %v2241 = vunpack.c.h.b16 %v2116
        %v2242 = vunpack.c.l.b16 %v2117
        %v2243 = vunpack.c.h.b16 %v2117
        %v2244 = vunpack.c.l.b16 %v2118
        %v2245 = vunpack.c.h.b16 %v2118
        %v2246 = vunpack.c.l.b16 %v2119
        %v2247 = vunpack.c.h.b16 %v2119
        %v2248 = vpack.c.b16 %v2170, %v2168
        %v2249 = vpack.c.b16 %v2171, %v2169
        %v2250 = vpack.c.b16 %v2174, %v2172
        %v2251 = vpack.c.b16 %v2175, %v2173
        %v2252 = vpack.c.b16 %v2178, %v2176
        %v2253 = vpack.c.b16 %v2179, %v2177
        %v2254 = vpack.c.b16 %v2182, %v2180
        %v2255 = vpack.c.b16 %v2183, %v2181
        %v2256 = vpack.c.b16 %v2186, %v2184
        %v2257 = vpack.c.b16 %v2187, %v2185
        %v2258 = vpack.c.b16 %v2190, %v2188
        %v2259 = vpack.c.b16 %v2191, %v2189
        %v2260 = vpack.c.b16 %v2194, %v2192
        %v2261 = vpack.c.b16 %v2195, %v2193
        %v2262 = vpack.c.b16 %v2198, %v2196
        %v2263 = vpack.c.b16 %v2199, %v2197
        %v2264 = vpack.c.b16 %v2202, %v2200
        %v2265 = vpack.c.b16 %v2203, %v2201
        %v2266 = vpack.c.b16 %v2206, %v2204
        %v2267 = vpack.c.b16 %v2207, %v2205
        %v2268 = vpack.c.b16 %v2210, %v2208
        %v2269 = vpack.c.b16 %v2211, %v2209
        %v2270 = vpack.c.b16 %v2214, %v2212
        %v2271 = vpack.c.b16 %v2215, %v2213
        %v2272 = vpack.c.b16 %v2218, %v2216
        %v2273 = vpack.c.b16 %v2219, %v2217
        %v2274 = vpack.c.b16 %v2222, %v2220
        %v2275 = vpack.c.b16 %v2223, %v2221
        %v2276 = vpack.c.b16 %v2226, %v2224
        %v2277 = vpack.c.b16 %v2227, %v2225
        %v2278 = vpack.c.b16 %v2230, %v2228
        %v2279 = vpack.c.b16 %v2231, %v2229
        %v2280 = vpack.c.b16 %v2234, %v2232
        %v2281 = vpack.c.b16 %v2235, %v2233
        %v2282 = vpack.c.b16 %v2238, %v2236
        %v2283 = vpack.c.b16 %v2239, %v2237
        %v2284 = vpack.c.b16 %v2242, %v2240
        %v2285 = vpack.c.b16 %v2243, %v2241
        %v2286 = vpack.c.b16 %v2246, %v2244
        %v2287 = vpack.c.b16 %v2247, %v2245
        %v2329 = vsel %vm593, %v2125, 0
        %2331 = vmatprep.subr.bf16.mxu0 %v2249
        %2332 = vmatpush1.bf16.msra.mxu0 %v2248
        %2333 = vmatprep.subr.bf16.mxu0 %v2251
        %2334 = vmatpush1.bf16.msra.mxu0 %v2250
        %2335 = vmatprep.subr.bf16.mxu0 %v2253
        %2336 = vmatpush1.bf16.msra.mxu0 %v2252
        %2337 = vmatprep.subr.bf16.mxu0 %v2255
        %2338 = vmatpush1.bf16.msra.mxu0 %v2254
        %2339 = vmatprep.subr.bf16.mxu0 %v2257
        %2340 = vmatpush1.bf16.msra.mxu0 %v2256
        %2341 = vmatprep.subr.bf16.mxu0 %v2259
        %2342 = vmatpush1.bf16.msra.mxu0 %v2258
        %2343 = vmatprep.subr.bf16.mxu0 %v2261
        %2344 = vmatpush1.bf16.msra.mxu0 %v2260
        %2345 = vmatprep.subr.bf16.mxu0 %v2263
        %2346 = vmatpush1.bf16.msra.mxu0 %v2262
        %2347 = vmatprep.subr.bf16.mxu0 %v2265
        %2348 = vmatpush1.bf16.msra.mxu0 %v2264
        %2349 = vmatprep.subr.bf16.mxu0 %v2267
        %2350 = vmatpush1.bf16.msra.mxu0 %v2266
        %2351 = vmatprep.subr.bf16.mxu0 %v2269
        %2352 = vmatpush1.bf16.msra.mxu0 %v2268
        %2353 = vmatprep.subr.bf16.mxu0 %v2271
        %2354 = vmatpush1.bf16.msra.mxu0 %v2270
        %2355 = vmatprep.subr.bf16.mxu0 %v2273
        %2356 = vmatpush1.bf16.msra.mxu0 %v2272
        %2357 = vmatprep.subr.bf16.mxu0 %v2275
        %2358 = vmatpush1.bf16.msra.mxu0 %v2274
        %2359 = vmatprep.subr.bf16.mxu0 %v2277
        %2360 = vmatpush1.bf16.msra.mxu0 %v2276
        %2361 = vmatprep.subr.bf16.mxu0 %v2279
        %2362 = vmatpush1.bf16.msra.mxu0 %v2278
        %2363 = vmatprep.mubr.bf16.mxu0 %v2124
        %2364 = vmatmul.mubr.bf16.gmra.mrb[0].mxu0 %v2123
        %v2365 = vpop.f32.mrb[0].mxu0
        %v2366 = vadd.f32 0.0, %v2365
        %v2367 = vpop.f32.mrb[0].mxu0
        %v2368 = vadd.f32 0.0, %v2367
        %v2369 = vpop.f32.mrb[0].mxu0
        %v2370 = vadd.f32 0.0, %v2369
        %v2371 = vpop.f32.mrb[0].mxu0
        %v2372 = vadd.f32 0.0, %v2371
        %2373 = vdwg.mxu0
        %2374 = vmatprep.subr.bf16.mxu0 %v2281
        %2375 = vmatpush1.bf16.msra.mxu0 %v2280
        %2376 = vmatprep.subr.bf16.mxu0 %v2283
        %2377 = vmatpush1.bf16.msra.mxu0 %v2282
        %2378 = vmatprep.subr.bf16.mxu0 %v2285
        %2379 = vmatpush1.bf16.msra.mxu0 %v2284
        %2380 = vmatprep.subr.bf16.mxu0 %v2287
        %2381 = vmatpush1.bf16.msra.mxu0 %v2286
        %2382 = vmatprep.subr.bf16.mxu0 0
        %2383 = vmatpush1.bf16.msra.mxu0 0
        %2384 = vmatprep.subr.bf16.mxu0 0
        %2385 = vmatpush1.bf16.msra.mxu0 0
        %2386 = vmatprep.subr.bf16.mxu0 0
        %2387 = vmatpush1.bf16.msra.mxu0 0
        %2388 = vmatprep.subr.bf16.mxu0 0
        %2389 = vmatpush1.bf16.msra.mxu0 0
        %2390 = vmatprep.subr.bf16.mxu0 0
        %2391 = vmatpush1.bf16.msra.mxu0 0
        %2392 = vmatprep.subr.bf16.mxu0 0
        %2393 = vmatpush1.bf16.msra.mxu0 0
        %2394 = vmatprep.subr.bf16.mxu0 0
        %2395 = vmatpush1.bf16.msra.mxu0 0
        %2396 = vmatprep.subr.bf16.mxu0 0
        %2397 = vmatpush1.bf16.msra.mxu0 0
        %2398 = vmatprep.subr.bf16.mxu0 0
        %2399 = vmatpush1.bf16.msra.mxu0 0
        %2400 = vmatprep.subr.bf16.mxu0 0
        %2401 = vmatpush1.bf16.msra.mxu0 0
        %2402 = vmatprep.subr.bf16.mxu0 0
        %2403 = vmatpush1.bf16.msra.mxu0 0
        %2404 = vmatprep.subr.bf16.mxu0 0
        %2405 = vmatpush1.bf16.msra.mxu0 0
        %2406 = vmatprep.mubr.bf16.mxu0 0
        %2407 = vmatmul.mubr.bf16.gmra.mrb[0].mxu0 %v2329
        %v2408 = vpop.f32.mrb[0].mxu0
        %v2409 = vadd.f32 %v2366, %v2408
        %v2410 = vpop.f32.mrb[0].mxu0
        %v2411 = vadd.f32 %v2368, %v2410
        %v2412 = vpop.f32.mrb[0].mxu0
        %v2413 = vadd.f32 %v2370, %v2412
        %v2414 = vpop.f32.mrb[0].mxu0
        %v2415 = vadd.f32 %v2372, %v2414
        %2416 = vdwg.mxu0
        %v2417 = vadd.f32 %v2065, %v2409
        %v2418 = vadd.f32 %v2066, %v2411
        %v2419 = vadd.f32 %v2067, %v2413
        %v2420 = vadd.f32 %v2068, %v2415
        %s2421 = scalar_lea.vmem [#allocation2], 1920
        %v2422 = vld [vmem:[%s2421] sm:$0xff]
        %v2423 = vld [vmem:[%s2421 + $0x8] sm:$0xff]
        %v2424 = vld [vmem:[%s2421 + $0x10] sm:$0xff]
        %v2425 = vld [vmem:[%s2421 + $0x18] sm:$0xff]
        %v2426 = vld [vmem:[%s2421 + $0x20] sm:$0xff]
        %v2427 = vld [vmem:[%s2421 + $0x28] sm:$0xff]
        %v2428 = vld [vmem:[%s2421 + $0x30] sm:$0xff]
        %v2429 = vld [vmem:[%s2421 + $0x38] sm:$0xff]
        %v2430 = vld [vmem:[%s2421 + $0x40] sm:$0xff]
        %v2431 = vld [vmem:[%s2421 + $0x48] sm:$0xff]
        %v2432 = vld [vmem:[%s2421 + $0x50] sm:$0xff]
        %v2433 = vld [vmem:[%s2421 + $0x58] sm:$0xff]
        %v2434 = vld [vmem:[%s2421 + $0x60] sm:$0xff]
        %v2435 = vld [vmem:[%s2421 + $0x68] sm:$0xff]
        %v2436 = vld [vmem:[%s2421 + $0x70] sm:$0xff]
        %v2437 = vld [vmem:[%s2421 + $0x78] sm:$0xff]
        %v2438 = vld [vmem:[%s2421 + $0x80] sm:$0xff]
        %v2439 = vld [vmem:[%s2421 + $0x88] sm:$0xff]
        %v2440 = vld [vmem:[%s2421 + $0x90] sm:$0xff]
        %v2441 = vld [vmem:[%s2421 + $0x98] sm:$0xff]
        %v2442 = vld [vmem:[%s2421 + $0xa0] sm:$0xff]
        %v2443 = vld [vmem:[%s2421 + $0xa8] sm:$0xff]
        %v2444 = vld [vmem:[%s2421 + $0xb0] sm:$0xff]
        %v2445 = vld [vmem:[%s2421 + $0xb8] sm:$0xff]
        %v2446 = vld [vmem:[%s2421 + $0xc0] sm:$0xff]
        %v2447 = vld [vmem:[%s2421 + $0xc8] sm:$0xff]
        %v2448 = vld [vmem:[%s2421 + $0xd0] sm:$0xff]
        %v2449 = vld [vmem:[%s2421 + $0xd8] sm:$0xff]
        %v2450 = vld [vmem:[%s2421 + $0xe0] sm:$0xff]
        %v2451 = vld [vmem:[%s2421 + $0xe8] sm:$0xff]
        %v2452 = vld [vmem:[%s2421 + $0xf0] sm:$0xff]
        %v2453 = vld [vmem:[%s2421 + $0xf8] sm:$0xff]
        %v2454 = vld [vmem:[%s2421 + $0x100] sm:$0xff]
        %v2455 = vld [vmem:[%s2421 + $0x108] sm:$0xff]
        %v2456 = vld [vmem:[%s2421 + $0x110] sm:$0xff]
        %v2457 = vld [vmem:[%s2421 + $0x118] sm:$0xff]
        %v2458 = vld [vmem:[%s2421 + $0x120] sm:$0xff]
        %v2459 = vld [vmem:[%s2421 + $0x128] sm:$0xff]
        %v2460 = vld [vmem:[%s2421 + $0x130] sm:$0xff]
        %v2461 = vld [vmem:[%s2421 + $0x138] sm:$0xff]
        %v2464 = vunpack.c.l.b16 %v238
        %v2465 = vunpack.c.h.b16 %v238
        %v2466 = vunpack.c.l.b16 %v239
        %v2467 = vpack.c.b16 %v2464, %v1398
        %v2468 = vpack.c.b16 %v2465, %v1399
        %v2469 = vpack.c.b16 %v2466, %v1400
        %v2512 = vunpack.c.l.b16 %v2422
        %v2513 = vunpack.c.h.b16 %v2422
        %v2514 = vunpack.c.l.b16 %v2423
        %v2515 = vunpack.c.h.b16 %v2423
        %v2516 = vunpack.c.l.b16 %v2424
        %v2517 = vunpack.c.h.b16 %v2424
        %v2518 = vunpack.c.l.b16 %v2425
        %v2519 = vunpack.c.h.b16 %v2425
        %v2520 = vunpack.c.l.b16 %v2426
        %v2521 = vunpack.c.h.b16 %v2426
        %v2522 = vunpack.c.l.b16 %v2427
        %v2523 = vunpack.c.h.b16 %v2427
        %v2524 = vunpack.c.l.b16 %v2428
        %v2525 = vunpack.c.h.b16 %v2428
        %v2526 = vunpack.c.l.b16 %v2429
        %v2527 = vunpack.c.h.b16 %v2429
        %v2528 = vunpack.c.l.b16 %v2430
        %v2529 = vunpack.c.h.b16 %v2430
        %v2530 = vunpack.c.l.b16 %v2431
        %v2531 = vunpack.c.h.b16 %v2431
        %v2532 = vunpack.c.l.b16 %v2432
        %v2533 = vunpack.c.h.b16 %v2432
        %v2534 = vunpack.c.l.b16 %v2433
        %v2535 = vunpack.c.h.b16 %v2433
        %v2536 = vunpack.c.l.b16 %v2434
        %v2537 = vunpack.c.h.b16 %v2434
        %v2538 = vunpack.c.l.b16 %v2435
        %v2539 = vunpack.c.h.b16 %v2435
        %v2540 = vunpack.c.l.b16 %v2436
        %v2541 = vunpack.c.h.b16 %v2436
        %v2542 = vunpack.c.l.b16 %v2437
        %v2543 = vunpack.c.h.b16 %v2437
        %v2544 = vunpack.c.l.b16 %v2438
        %v2545 = vunpack.c.h.b16 %v2438
        %v2546 = vunpack.c.l.b16 %v2439
        %v2547 = vunpack.c.h.b16 %v2439
        %v2548 = vunpack.c.l.b16 %v2440
        %v2549 = vunpack.c.h.b16 %v2440
        %v2550 = vunpack.c.l.b16 %v2441
        %v2551 = vunpack.c.h.b16 %v2441
        %v2552 = vunpack.c.l.b16 %v2442
        %v2553 = vunpack.c.h.b16 %v2442
        %v2554 = vunpack.c.l.b16 %v2443
        %v2555 = vunpack.c.h.b16 %v2443
        %v2556 = vunpack.c.l.b16 %v2444
        %v2557 = vunpack.c.h.b16 %v2444
        %v2558 = vunpack.c.l.b16 %v2445
        %v2559 = vunpack.c.h.b16 %v2445
        %v2560 = vunpack.c.l.b16 %v2446
        %v2561 = vunpack.c.h.b16 %v2446
        %v2562 = vunpack.c.l.b16 %v2447
        %v2563 = vunpack.c.h.b16 %v2447
        %v2564 = vunpack.c.l.b16 %v2448
        %v2565 = vunpack.c.h.b16 %v2448
        %v2566 = vunpack.c.l.b16 %v2449
        %v2567 = vunpack.c.h.b16 %v2449
        %v2568 = vunpack.c.l.b16 %v2450
        %v2569 = vunpack.c.h.b16 %v2450
        %v2570 = vunpack.c.l.b16 %v2451
        %v2571 = vunpack.c.h.b16 %v2451
        %v2572 = vunpack.c.l.b16 %v2452
        %v2573 = vunpack.c.h.b16 %v2452
        %v2574 = vunpack.c.l.b16 %v2453
        %v2575 = vunpack.c.h.b16 %v2453
        %v2576 = vunpack.c.l.b16 %v2454
        %v2577 = vunpack.c.h.b16 %v2454
        %v2578 = vunpack.c.l.b16 %v2455
        %v2579 = vunpack.c.h.b16 %v2455
        %v2580 = vunpack.c.l.b16 %v2456
        %v2581 = vunpack.c.h.b16 %v2456
        %v2582 = vunpack.c.l.b16 %v2457
        %v2583 = vunpack.c.h.b16 %v2457
        %v2584 = vunpack.c.l.b16 %v2458
        %v2585 = vunpack.c.h.b16 %v2458
        %v2586 = vunpack.c.l.b16 %v2459
        %v2587 = vunpack.c.h.b16 %v2459
        %v2588 = vunpack.c.l.b16 %v2460
        %v2589 = vunpack.c.h.b16 %v2460
        %v2590 = vunpack.c.l.b16 %v2461
        %v2591 = vunpack.c.h.b16 %v2461
        %v2592 = vpack.c.b16 %v2514, %v2512
        %v2593 = vpack.c.b16 %v2515, %v2513
        %v2594 = vpack.c.b16 %v2518, %v2516
        %v2595 = vpack.c.b16 %v2519, %v2517
        %v2596 = vpack.c.b16 %v2522, %v2520
        %v2597 = vpack.c.b16 %v2523, %v2521
        %v2598 = vpack.c.b16 %v2526, %v2524
        %v2599 = vpack.c.b16 %v2527, %v2525
        %v2600 = vpack.c.b16 %v2530, %v2528
        %v2601 = vpack.c.b16 %v2531, %v2529
        %v2602 = vpack.c.b16 %v2534, %v2532
        %v2603 = vpack.c.b16 %v2535, %v2533
        %v2604 = vpack.c.b16 %v2538, %v2536
        %v2605 = vpack.c.b16 %v2539, %v2537
        %v2606 = vpack.c.b16 %v2542, %v2540
        %v2607 = vpack.c.b16 %v2543, %v2541
        %v2608 = vpack.c.b16 %v2546, %v2544
        %v2609 = vpack.c.b16 %v2547, %v2545
        %v2610 = vpack.c.b16 %v2550, %v2548
        %v2611 = vpack.c.b16 %v2551, %v2549
        %v2612 = vpack.c.b16 %v2554, %v2552
        %v2613 = vpack.c.b16 %v2555, %v2553
        %v2614 = vpack.c.b16 %v2558, %v2556
        %v2615 = vpack.c.b16 %v2559, %v2557
        %v2616 = vpack.c.b16 %v2562, %v2560
        %v2617 = vpack.c.b16 %v2563, %v2561
        %v2618 = vpack.c.b16 %v2566, %v2564
        %v2619 = vpack.c.b16 %v2567, %v2565
        %v2620 = vpack.c.b16 %v2570, %v2568
        %v2621 = vpack.c.b16 %v2571, %v2569
        %v2622 = vpack.c.b16 %v2574, %v2572
        %v2623 = vpack.c.b16 %v2575, %v2573
        %v2624 = vpack.c.b16 %v2578, %v2576
        %v2625 = vpack.c.b16 %v2579, %v2577
        %v2626 = vpack.c.b16 %v2582, %v2580
        %v2627 = vpack.c.b16 %v2583, %v2581
        %v2628 = vpack.c.b16 %v2586, %v2584
        %v2629 = vpack.c.b16 %v2587, %v2585
        %v2630 = vpack.c.b16 %v2590, %v2588
        %v2631 = vpack.c.b16 %v2591, %v2589
        %v2673 = vsel %vm593, %v2469, 0
        %2675 = vmatprep.subr.bf16.mxu0 %v2593
        %2676 = vmatpush1.bf16.msra.mxu0 %v2592
        %2677 = vmatprep.subr.bf16.mxu0 %v2595
        %2678 = vmatpush1.bf16.msra.mxu0 %v2594
        %2679 = vmatprep.subr.bf16.mxu0 %v2597
        %2680 = vmatpush1.bf16.msra.mxu0 %v2596
        %2681 = vmatprep.subr.bf16.mxu0 %v2599
        %2682 = vmatpush1.bf16.msra.mxu0 %v2598
        %2683 = vmatprep.subr.bf16.mxu0 %v2601
        %2684 = vmatpush1.bf16.msra.mxu0 %v2600
        %2685 = vmatprep.subr.bf16.mxu0 %v2603
        %2686 = vmatpush1.bf16.msra.mxu0 %v2602
        %2687 = vmatprep.subr.bf16.mxu0 %v2605
        %2688 = vmatpush1.bf16.msra.mxu0 %v2604
        %2689 = vmatprep.subr.bf16.mxu0 %v2607
        %2690 = vmatpush1.bf16.msra.mxu0 %v2606
        %2691 = vmatprep.subr.bf16.mxu0 %v2609
        %2692 = vmatpush1.bf16.msra.mxu0 %v2608
        %2693 = vmatprep.subr.bf16.mxu0 %v2611
        %2694 = vmatpush1.bf16.msra.mxu0 %v2610
        %2695 = vmatprep.subr.bf16.mxu0 %v2613
        %2696 = vmatpush1.bf16.msra.mxu0 %v2612
        %2697 = vmatprep.subr.bf16.mxu0 %v2615
        %2698 = vmatpush1.bf16.msra.mxu0 %v2614
        %2699 = vmatprep.subr.bf16.mxu0 %v2617
        %2700 = vmatpush1.bf16.msra.mxu0 %v2616
        %2701 = vmatprep.subr.bf16.mxu0 %v2619
        %2702 = vmatpush1.bf16.msra.mxu0 %v2618
        %2703 = vmatprep.subr.bf16.mxu0 %v2621
        %2704 = vmatpush1.bf16.msra.mxu0 %v2620
        %2705 = vmatprep.subr.bf16.mxu0 %v2623
        %2706 = vmatpush1.bf16.msra.mxu0 %v2622
        %2707 = vmatprep.mubr.bf16.mxu0 %v2468
        %2708 = vmatmul.mubr.bf16.gmra.mrb[0].mxu0 %v2467
        %v2709 = vpop.f32.mrb[0].mxu0
        %v2710 = vadd.f32 0.0, %v2709
        %v2711 = vpop.f32.mrb[0].mxu0
        %v2712 = vadd.f32 0.0, %v2711
        %v2713 = vpop.f32.mrb[0].mxu0
        %v2714 = vadd.f32 0.0, %v2713
        %v2715 = vpop.f32.mrb[0].mxu0
        %v2716 = vadd.f32 0.0, %v2715
        %2717 = vdwg.mxu0
        %2718 = vmatprep.subr.bf16.mxu0 %v2625
        %2719 = vmatpush1.bf16.msra.mxu0 %v2624
        %2720 = vmatprep.subr.bf16.mxu0 %v2627
        %2721 = vmatpush1.bf16.msra.mxu0 %v2626
        %2722 = vmatprep.subr.bf16.mxu0 %v2629
        %2723 = vmatpush1.bf16.msra.mxu0 %v2628
        %2724 = vmatprep.subr.bf16.mxu0 %v2631
        %2725 = vmatpush1.bf16.msra.mxu0 %v2630
        %2726 = vmatprep.subr.bf16.mxu0 0
        %2727 = vmatpush1.bf16.msra.mxu0 0
        %2728 = vmatprep.subr.bf16.mxu0 0
        %2729 = vmatpush1.bf16.msra.mxu0 0
        %2730 = vmatprep.subr.bf16.mxu0 0
        %2731 = vmatpush1.bf16.msra.mxu0 0
        %2732 = vmatprep.subr.bf16.mxu0 0
        %2733 = vmatpush1.bf16.msra.mxu0 0
        %2734 = vmatprep.subr.bf16.mxu0 0
        %2735 = vmatpush1.bf16.msra.mxu0 0
        %2736 = vmatprep.subr.bf16.mxu0 0
        %2737 = vmatpush1.bf16.msra.mxu0 0
        %2738 = vmatprep.subr.bf16.mxu0 0
        %2739 = vmatpush1.bf16.msra.mxu0 0
        %2740 = vmatprep.subr.bf16.mxu0 0
        %2741 = vmatpush1.bf16.msra.mxu0 0
        %2742 = vmatprep.subr.bf16.mxu0 0
        %2743 = vmatpush1.bf16.msra.mxu0 0
        %2744 = vmatprep.subr.bf16.mxu0 0
        %2745 = vmatpush1.bf16.msra.mxu0 0
        %2746 = vmatprep.subr.bf16.mxu0 0
        %2747 = vmatpush1.bf16.msra.mxu0 0
        %2748 = vmatprep.subr.bf16.mxu0 0
        %2749 = vmatpush1.bf16.msra.mxu0 0
        %2750 = vmatprep.mubr.bf16.mxu0 0
        %2751 = vmatmul.mubr.bf16.gmra.mrb[0].mxu0 %v2673
        %v2752 = vpop.f32.mrb[0].mxu0
        %v2753 = vadd.f32 %v2710, %v2752
        %v2754 = vpop.f32.mrb[0].mxu0
        %v2755 = vadd.f32 %v2712, %v2754
        %v2756 = vpop.f32.mrb[0].mxu0
        %v2757 = vadd.f32 %v2714, %v2756
        %v2758 = vpop.f32.mrb[0].mxu0
        %v2759 = vadd.f32 %v2716, %v2758
        %2760 = vdwg.mxu0
        %v2761 = vadd.f32 %v2417, %v2753
        %v2762 = vadd.f32 %v2418, %v2755
        %v2763 = vadd.f32 %v2419, %v2757
        %v2764 = vadd.f32 %v2420, %v2759
        %v2766 = vshrl.u32 %v238, 16
        %v2768 = vrot.slane %v2766, 4
        %v2769 = vshll.u32 %v238, 16
        %v2771 = vrot.slane %v2769, 5
        %v2772 = vor.u32 %v2768, %v2771
        %v2773 = vrot.slane %v2772, 4
        %v2775 = vshll.u32 %v240, 16
        %v2777 = vrot.slane %v2775, 5
        %v2778 = vsel %vm284, %v2773, %v2777
        %v2780 = vshrl.u32 %v239, 16
        %v2782 = vrot.slane %v2780, 4
        %v2783 = vshll.u32 %v239, 16
        %v2785 = vrot.slane %v2783, 5
        %v2786 = vor.u32 %v2782, %v2785
        %v2787 = vrot.slane %v2786, 4
        %v2789 = vshll.u32 %v241, 16
        %v2791 = vrot.slane %v2789, 5
        %v2792 = vsel %vm284, %v2787, %v2791
        %s2793 = scalar_lea.vmem [#allocation2], 2240
        %v2794 = vld [vmem:[%s2793] sm:$0xff]
        %v2795 = vld [vmem:[%s2793 + $0x8] sm:$0xff]
        %v2796 = vld [vmem:[%s2793 + $0x10] sm:$0xff]
        %v2797 = vld [vmem:[%s2793 + $0x18] sm:$0xff]
        %v2798 = vld [vmem:[%s2793 + $0x20] sm:$0xff]
        %v2799 = vld [vmem:[%s2793 + $0x28] sm:$0xff]
        %v2800 = vld [vmem:[%s2793 + $0x30] sm:$0xff]
        %v2801 = vld [vmem:[%s2793 + $0x38] sm:$0xff]
        %v2802 = vld [vmem:[%s2793 + $0x40] sm:$0xff]
        %v2803 = vld [vmem:[%s2793 + $0x48] sm:$0xff]
        %v2804 = vld [vmem:[%s2793 + $0x50] sm:$0xff]
        %v2805 = vld [vmem:[%s2793 + $0x58] sm:$0xff]
        %v2806 = vld [vmem:[%s2793 + $0x60] sm:$0xff]
        %v2807 = vld [vmem:[%s2793 + $0x68] sm:$0xff]
        %v2808 = vld [vmem:[%s2793 + $0x70] sm:$0xff]
        %v2809 = vld [vmem:[%s2793 + $0x78] sm:$0xff]
        %v2810 = vld [vmem:[%s2793 + $0x80] sm:$0xff]
        %v2811 = vld [vmem:[%s2793 + $0x88] sm:$0xff]
        %v2812 = vld [vmem:[%s2793 + $0x90] sm:$0xff]
        %v2813 = vld [vmem:[%s2793 + $0x98] sm:$0xff]
        %v2814 = vld [vmem:[%s2793 + $0xa0] sm:$0xff]
        %v2815 = vld [vmem:[%s2793 + $0xa8] sm:$0xff]
        %v2816 = vld [vmem:[%s2793 + $0xb0] sm:$0xff]
        %v2817 = vld [vmem:[%s2793 + $0xb8] sm:$0xff]
        %v2818 = vld [vmem:[%s2793 + $0xc0] sm:$0xff]
        %v2819 = vld [vmem:[%s2793 + $0xc8] sm:$0xff]
        %v2820 = vld [vmem:[%s2793 + $0xd0] sm:$0xff]
        %v2821 = vld [vmem:[%s2793 + $0xd8] sm:$0xff]
        %v2822 = vld [vmem:[%s2793 + $0xe0] sm:$0xff]
        %v2823 = vld [vmem:[%s2793 + $0xe8] sm:$0xff]
        %v2824 = vld [vmem:[%s2793 + $0xf0] sm:$0xff]
        %v2825 = vld [vmem:[%s2793 + $0xf8] sm:$0xff]
        %v2826 = vld [vmem:[%s2793 + $0x100] sm:$0xff]
        %v2827 = vld [vmem:[%s2793 + $0x108] sm:$0xff]
        %v2828 = vld [vmem:[%s2793 + $0x110] sm:$0xff]
        %v2829 = vld [vmem:[%s2793 + $0x118] sm:$0xff]
        %v2830 = vld [vmem:[%s2793 + $0x120] sm:$0xff]
        %v2831 = vld [vmem:[%s2793 + $0x128] sm:$0xff]
        %v2832 = vld [vmem:[%s2793 + $0x130] sm:$0xff]
        %v2833 = vld [vmem:[%s2793 + $0x138] sm:$0xff]
        %v2834 = vunpack.c.l.b16 %v2778
        %v2835 = vunpack.c.h.b16 %v2778
        %v2836 = vunpack.c.l.b16 %v2792
        %v2837 = vpack.c.b16 %v2834, %v1768
        %v2838 = vpack.c.b16 %v2835, %v1769
        %v2839 = vpack.c.b16 %v2836, %v1770
        %v2882 = vunpack.c.l.b16 %v2794
        %v2883 = vunpack.c.h.b16 %v2794
        %v2884 = vunpack.c.l.b16 %v2795
        %v2885 = vunpack.c.h.b16 %v2795
        %v2886 = vunpack.c.l.b16 %v2796
        %v2887 = vunpack.c.h.b16 %v2796
        %v2888 = vunpack.c.l.b16 %v2797
        %v2889 = vunpack.c.h.b16 %v2797
        %v2890 = vunpack.c.l.b16 %v2798
        %v2891 = vunpack.c.h.b16 %v2798
        %v2892 = vunpack.c.l.b16 %v2799
        %v2893 = vunpack.c.h.b16 %v2799
        %v2894 = vunpack.c.l.b16 %v2800
        %v2895 = vunpack.c.h.b16 %v2800
        %v2896 = vunpack.c.l.b16 %v2801
        %v2897 = vunpack.c.h.b16 %v2801
        %v2898 = vunpack.c.l.b16 %v2802
        %v2899 = vunpack.c.h.b16 %v2802
        %v2900 = vunpack.c.l.b16 %v2803
        %v2901 = vunpack.c.h.b16 %v2803
        %v2902 = vunpack.c.l.b16 %v2804
        %v2903 = vunpack.c.h.b16 %v2804
        %v2904 = vunpack.c.l.b16 %v2805
        %v2905 = vunpack.c.h.b16 %v2805
        %v2906 = vunpack.c.l.b16 %v2806
        %v2907 = vunpack.c.h.b16 %v2806
        %v2908 = vunpack.c.l.b16 %v2807
        %v2909 = vunpack.c.h.b16 %v2807
        %v2910 = vunpack.c.l.b16 %v2808
        %v2911 = vunpack.c.h.b16 %v2808
        %v2912 = vunpack.c.l.b16 %v2809
        %v2913 = vunpack.c.h.b16 %v2809
        %v2914 = vunpack.c.l.b16 %v2810
        %v2915 = vunpack.c.h.b16 %v2810
        %v2916 = vunpack.c.l.b16 %v2811
        %v2917 = vunpack.c.h.b16 %v2811
        %v2918 = vunpack.c.l.b16 %v2812
        %v2919 = vunpack.c.h.b16 %v2812
        %v2920 = vunpack.c.l.b16 %v2813
        %v2921 = vunpack.c.h.b16 %v2813
        %v2922 = vunpack.c.l.b16 %v2814
        %v2923 = vunpack.c.h.b16 %v2814
        %v2924 = vunpack.c.l.b16 %v2815
        %v2925 = vunpack.c.h.b16 %v2815
        %v2926 = vunpack.c.l.b16 %v2816
        %v2927 = vunpack.c.h.b16 %v2816
        %v2928 = vunpack.c.l.b16 %v2817
        %v2929 = vunpack.c.h.b16 %v2817
        %v2930 = vunpack.c.l.b16 %v2818
        %v2931 = vunpack.c.h.b16 %v2818
        %v2932 = vunpack.c.l.b16 %v2819
        %v2933 = vunpack.c.h.b16 %v2819
        %v2934 = vunpack.c.l.b16 %v2820
        %v2935 = vunpack.c.h.b16 %v2820
        %v2936 = vunpack.c.l.b16 %v2821
        %v2937 = vunpack.c.h.b16 %v2821
        %v2938 = vunpack.c.l.b16 %v2822
        %v2939 = vunpack.c.h.b16 %v2822
        %v2940 = vunpack.c.l.b16 %v2823
        %v2941 = vunpack.c.h.b16 %v2823
        %v2942 = vunpack.c.l.b16 %v2824
        %v2943 = vunpack.c.h.b16 %v2824
        %v2944 = vunpack.c.l.b16 %v2825
        %v2945 = vunpack.c.h.b16 %v2825
        %v2946 = vunpack.c.l.b16 %v2826
        %v2947 = vunpack.c.h.b16 %v2826
        %v2948 = vunpack.c.l.b16 %v2827
        %v2949 = vunpack.c.h.b16 %v2827
        %v2950 = vunpack.c.l.b16 %v2828
        %v2951 = vunpack.c.h.b16 %v2828
        %v2952 = vunpack.c.l.b16 %v2829
        %v2953 = vunpack.c.h.b16 %v2829
        %v2954 = vunpack.c.l.b16 %v2830
        %v2955 = vunpack.c.h.b16 %v2830
        %v2956 = vunpack.c.l.b16 %v2831
        %v2957 = vunpack.c.h.b16 %v2831
        %v2958 = vunpack.c.l.b16 %v2832
        %v2959 = vunpack.c.h.b16 %v2832
        %v2960 = vunpack.c.l.b16 %v2833
        %v2961 = vunpack.c.h.b16 %v2833
        %v2962 = vpack.c.b16 %v2884, %v2882
        %v2963 = vpack.c.b16 %v2885, %v2883
        %v2964 = vpack.c.b16 %v2888, %v2886
        %v2965 = vpack.c.b16 %v2889, %v2887
        %v2966 = vpack.c.b16 %v2892, %v2890
        %v2967 = vpack.c.b16 %v2893, %v2891
        %v2968 = vpack.c.b16 %v2896, %v2894
        %v2969 = vpack.c.b16 %v2897, %v2895
        %v2970 = vpack.c.b16 %v2900, %v2898
        %v2971 = vpack.c.b16 %v2901, %v2899
        %v2972 = vpack.c.b16 %v2904, %v2902
        %v2973 = vpack.c.b16 %v2905, %v2903
        %v2974 = vpack.c.b16 %v2908, %v2906
        %v2975 = vpack.c.b16 %v2909, %v2907
        %v2976 = vpack.c.b16 %v2912, %v2910
        %v2977 = vpack.c.b16 %v2913, %v2911
        %v2978 = vpack.c.b16 %v2916, %v2914
        %v2979 = vpack.c.b16 %v2917, %v2915
        %v2980 = vpack.c.b16 %v2920, %v2918
        %v2981 = vpack.c.b16 %v2921, %v2919
        %v2982 = vpack.c.b16 %v2924, %v2922
        %v2983 = vpack.c.b16 %v2925, %v2923
        %v2984 = vpack.c.b16 %v2928, %v2926
        %v2985 = vpack.c.b16 %v2929, %v2927
        %v2986 = vpack.c.b16 %v2932, %v2930
        %v2987 = vpack.c.b16 %v2933, %v2931
        %v2988 = vpack.c.b16 %v2936, %v2934
        %v2989 = vpack.c.b16 %v2937, %v2935
        %v2990 = vpack.c.b16 %v2940, %v2938
        %v2991 = vpack.c.b16 %v2941, %v2939
        %v2992 = vpack.c.b16 %v2944, %v2942
        %v2993 = vpack.c.b16 %v2945, %v2943
        %v2994 = vpack.c.b16 %v2948, %v2946
        %v2995 = vpack.c.b16 %v2949, %v2947
        %v2996 = vpack.c.b16 %v2952, %v2950
        %v2997 = vpack.c.b16 %v2953, %v2951
        %v2998 = vpack.c.b16 %v2956, %v2954
        %v2999 = vpack.c.b16 %v2957, %v2955
        %v3000 = vpack.c.b16 %v2960, %v2958
        %v3001 = vpack.c.b16 %v2961, %v2959
        %v3043 = vsel %vm593, %v2839, 0
        %3045 = vmatprep.subr.bf16.mxu0 %v2963
        %3046 = vmatpush1.bf16.msra.mxu0 %v2962
        %3047 = vmatprep.subr.bf16.mxu0 %v2965
        %3048 = vmatpush1.bf16.msra.mxu0 %v2964
        %3049 = vmatprep.subr.bf16.mxu0 %v2967
        %3050 = vmatpush1.bf16.msra.mxu0 %v2966
        %3051 = vmatprep.subr.bf16.mxu0 %v2969
        %3052 = vmatpush1.bf16.msra.mxu0 %v2968
        %3053 = vmatprep.subr.bf16.mxu0 %v2971
        %3054 = vmatpush1.bf16.msra.mxu0 %v2970
        %3055 = vmatprep.subr.bf16.mxu0 %v2973
        %3056 = vmatpush1.bf16.msra.mxu0 %v2972
        %3057 = vmatprep.subr.bf16.mxu0 %v2975
        %3058 = vmatpush1.bf16.msra.mxu0 %v2974
        %3059 = vmatprep.subr.bf16.mxu0 %v2977
        %3060 = vmatpush1.bf16.msra.mxu0 %v2976
        %3061 = vmatprep.subr.bf16.mxu0 %v2979
        %3062 = vmatpush1.bf16.msra.mxu0 %v2978
        %3063 = vmatprep.subr.bf16.mxu0 %v2981
        %3064 = vmatpush1.bf16.msra.mxu0 %v2980
        %3065 = vmatprep.subr.bf16.mxu0 %v2983
        %3066 = vmatpush1.bf16.msra.mxu0 %v2982
        %3067 = vmatprep.subr.bf16.mxu0 %v2985
        %3068 = vmatpush1.bf16.msra.mxu0 %v2984
        %3069 = vmatprep.subr.bf16.mxu0 %v2987
        %3070 = vmatpush1.bf16.msra.mxu0 %v2986
        %3071 = vmatprep.subr.bf16.mxu0 %v2989
        %3072 = vmatpush1.bf16.msra.mxu0 %v2988
        %3073 = vmatprep.subr.bf16.mxu0 %v2991
        %3074 = vmatpush1.bf16.msra.mxu0 %v2990
        %3075 = vmatprep.subr.bf16.mxu0 %v2993
        %3076 = vmatpush1.bf16.msra.mxu0 %v2992
        %3077 = vmatprep.mubr.bf16.mxu0 %v2838
        %3078 = vmatmul.mubr.bf16.gmra.mrb[0].mxu0 %v2837
        %v3079 = vpop.f32.mrb[0].mxu0
        %v3080 = vadd.f32 0.0, %v3079
        %v3081 = vpop.f32.mrb[0].mxu0
        %v3082 = vadd.f32 0.0, %v3081
        %v3083 = vpop.f32.mrb[0].mxu0
        %v3084 = vadd.f32 0.0, %v3083
        %v3085 = vpop.f32.mrb[0].mxu0
        %v3086 = vadd.f32 0.0, %v3085
        %3087 = vdwg.mxu0
        %3088 = vmatprep.subr.bf16.mxu0 %v2995
        %3089 = vmatpush1.bf16.msra.mxu0 %v2994
        %3090 = vmatprep.subr.bf16.mxu0 %v2997
        %3091 = vmatpush1.bf16.msra.mxu0 %v2996
        %3092 = vmatprep.subr.bf16.mxu0 %v2999
        %3093 = vmatpush1.bf16.msra.mxu0 %v2998
        %3094 = vmatprep.subr.bf16.mxu0 %v3001
        %3095 = vmatpush1.bf16.msra.mxu0 %v3000
        %3096 = vmatprep.subr.bf16.mxu0 0
        %3097 = vmatpush1.bf16.msra.mxu0 0
        %3098 = vmatprep.subr.bf16.mxu0 0
        %3099 = vmatpush1.bf16.msra.mxu0 0
        %3100 = vmatprep.subr.bf16.mxu0 0
        %3101 = vmatpush1.bf16.msra.mxu0 0
        %3102 = vmatprep.subr.bf16.mxu0 0
        %3103 = vmatpush1.bf16.msra.mxu0 0
        %3104 = vmatprep.subr.bf16.mxu0 0
        %3105 = vmatpush1.bf16.msra.mxu0 0
        %3106 = vmatprep.subr.bf16.mxu0 0
        %3107 = vmatpush1.bf16.msra.mxu0 0
        %3108 = vmatprep.subr.bf16.mxu0 0
        %3109 = vmatpush1.bf16.msra.mxu0 0
        %3110 = vmatprep.subr.bf16.mxu0 0
        %3111 = vmatpush1.bf16.msra.mxu0 0
        %3112 = vmatprep.subr.bf16.mxu0 0
        %3113 = vmatpush1.bf16.msra.mxu0 0
        %3114 = vmatprep.subr.bf16.mxu0 0
        %3115 = vmatpush1.bf16.msra.mxu0 0
        %3116 = vmatprep.subr.bf16.mxu0 0
        %3117 = vmatpush1.bf16.msra.mxu0 0
        %3118 = vmatprep.subr.bf16.mxu0 0
        %3119 = vmatpush1.bf16.msra.mxu0 0
        %3120 = vmatprep.mubr.bf16.mxu0 0
        %3121 = vmatmul.mubr.bf16.gmra.mrb[0].mxu0 %v3043
        %v3122 = vpop.f32.mrb[0].mxu0
        %v3123 = vadd.f32 %v3080, %v3122
        %v3124 = vpop.f32.mrb[0].mxu0
        %v3125 = vadd.f32 %v3082, %v3124
        %v3126 = vpop.f32.mrb[0].mxu0
        %v3127 = vadd.f32 %v3084, %v3126
        %v3128 = vpop.f32.mrb[0].mxu0
        %v3129 = vadd.f32 %v3086, %v3128
        %3130 = vdwg.mxu0
        %v3131 = vadd.f32 %v2761, %v3123
        %v3132 = vadd.f32 %v2762, %v3125
        %v3133 = vadd.f32 %v2763, %v3127
        %v3134 = vadd.f32 %v2764, %v3129
        %v3137 = vrot.slane %v238, 5
        %v3138 = vrot.slane %v3137, 4
        %v3139 = vrot.slane %v240, 5
        %v3140 = vsel %vm993, %v3138, %v3139
        %v3141 = vrot.slane %v239, 5
        %v3142 = vrot.slane %v3141, 4
        %v3143 = vrot.slane %v241, 5
        %v3144 = vsel %vm993, %v3142, %v3143
        %s3145 = scalar_lea.vmem [#allocation2], 2560
        %v3146 = vld [vmem:[%s3145] sm:$0xff]
        %v3147 = vld [vmem:[%s3145 + $0x8] sm:$0xff]
        %v3148 = vld [vmem:[%s3145 + $0x10] sm:$0xff]
        %v3149 = vld [vmem:[%s3145 + $0x18] sm:$0xff]
        %v3150 = vld [vmem:[%s3145 + $0x20] sm:$0xff]
        %v3151 = vld [vmem:[%s3145 + $0x28] sm:$0xff]
        %v3152 = vld [vmem:[%s3145 + $0x30] sm:$0xff]
        %v3153 = vld [vmem:[%s3145 + $0x38] sm:$0xff]
        %v3154 = vld [vmem:[%s3145 + $0x40] sm:$0xff]
        %v3155 = vld [vmem:[%s3145 + $0x48] sm:$0xff]
        %v3156 = vld [vmem:[%s3145 + $0x50] sm:$0xff]
        %v3157 = vld [vmem:[%s3145 + $0x58] sm:$0xff]
        %v3158 = vld [vmem:[%s3145 + $0x60] sm:$0xff]
        %v3159 = vld [vmem:[%s3145 + $0x68] sm:$0xff]
        %v3160 = vld [vmem:[%s3145 + $0x70] sm:$0xff]
        %v3161 = vld [vmem:[%s3145 + $0x78] sm:$0xff]
        %v3162 = vld [vmem:[%s3145 + $0x80] sm:$0xff]
        %v3163 = vld [vmem:[%s3145 + $0x88] sm:$0xff]
        %v3164 = vld [vmem:[%s3145 + $0x90] sm:$0xff]
        %v3165 = vld [vmem:[%s3145 + $0x98] sm:$0xff]
        %v3166 = vld [vmem:[%s3145 + $0xa0] sm:$0xff]
        %v3167 = vld [vmem:[%s3145 + $0xa8] sm:$0xff]
        %v3168 = vld [vmem:[%s3145 + $0xb0] sm:$0xff]
        %v3169 = vld [vmem:[%s3145 + $0xb8] sm:$0xff]
        %v3170 = vld [vmem:[%s3145 + $0xc0] sm:$0xff]
        %v3171 = vld [vmem:[%s3145 + $0xc8] sm:$0xff]
        %v3172 = vld [vmem:[%s3145 + $0xd0] sm:$0xff]
        %v3173 = vld [vmem:[%s3145 + $0xd8] sm:$0xff]
        %v3174 = vld [vmem:[%s3145 + $0xe0] sm:$0xff]
        %v3175 = vld [vmem:[%s3145 + $0xe8] sm:$0xff]
        %v3176 = vld [vmem:[%s3145 + $0xf0] sm:$0xff]
        %v3177 = vld [vmem:[%s3145 + $0xf8] sm:$0xff]
        %v3178 = vld [vmem:[%s3145 + $0x100] sm:$0xff]
        %v3179 = vld [vmem:[%s3145 + $0x108] sm:$0xff]
        %v3180 = vld [vmem:[%s3145 + $0x110] sm:$0xff]
        %v3181 = vld [vmem:[%s3145 + $0x118] sm:$0xff]
        %v3182 = vld [vmem:[%s3145 + $0x120] sm:$0xff]
        %v3183 = vld [vmem:[%s3145 + $0x128] sm:$0xff]
        %v3184 = vld [vmem:[%s3145 + $0x130] sm:$0xff]
        %v3185 = vld [vmem:[%s3145 + $0x138] sm:$0xff]
        %v3186 = vunpack.c.l.b16 %v3140
        %v3187 = vunpack.c.h.b16 %v3140
        %v3188 = vunpack.c.l.b16 %v3144
        %v3189 = vpack.c.b16 %v3186, %v2120
        %v3190 = vpack.c.b16 %v3187, %v2121
        %v3191 = vpack.c.b16 %v3188, %v2122
        %v3234 = vunpack.c.l.b16 %v3146
        %v3235 = vunpack.c.h.b16 %v3146
        %v3236 = vunpack.c.l.b16 %v3147
        %v3237 = vunpack.c.h.b16 %v3147
        %v3238 = vunpack.c.l.b16 %v3148
        %v3239 = vunpack.c.h.b16 %v3148
        %v3240 = vunpack.c.l.b16 %v3149
        %v3241 = vunpack.c.h.b16 %v3149
        %v3242 = vunpack.c.l.b16 %v3150
        %v3243 = vunpack.c.h.b16 %v3150
        %v3244 = vunpack.c.l.b16 %v3151
        %v3245 = vunpack.c.h.b16 %v3151
        %v3246 = vunpack.c.l.b16 %v3152
        %v3247 = vunpack.c.h.b16 %v3152
        %v3248 = vunpack.c.l.b16 %v3153
        %v3249 = vunpack.c.h.b16 %v3153
        %v3250 = vunpack.c.l.b16 %v3154
        %v3251 = vunpack.c.h.b16 %v3154
        %v3252 = vunpack.c.l.b16 %v3155
        %v3253 = vunpack.c.h.b16 %v3155
        %v3254 = vunpack.c.l.b16 %v3156
        %v3255 = vunpack.c.h.b16 %v3156
        %v3256 = vunpack.c.l.b16 %v3157
        %v3257 = vunpack.c.h.b16 %v3157
        %v3258 = vunpack.c.l.b16 %v3158
        %v3259 = vunpack.c.h.b16 %v3158
        %v3260 = vunpack.c.l.b16 %v3159
        %v3261 = vunpack.c.h.b16 %v3159
        %v3262 = vunpack.c.l.b16 %v3160
        %v3263 = vunpack.c.h.b16 %v3160
        %v3264 = vunpack.c.l.b16 %v3161
        %v3265 = vunpack.c.h.b16 %v3161
        %v3266 = vunpack.c.l.b16 %v3162
        %v3267 = vunpack.c.h.b16 %v3162
        %v3268 = vunpack.c.l.b16 %v3163
        %v3269 = vunpack.c.h.b16 %v3163
        %v3270 = vunpack.c.l.b16 %v3164
        %v3271 = vunpack.c.h.b16 %v3164
        %v3272 = vunpack.c.l.b16 %v3165
        %v3273 = vunpack.c.h.b16 %v3165
        %v3274 = vunpack.c.l.b16 %v3166
        %v3275 = vunpack.c.h.b16 %v3166
        %v3276 = vunpack.c.l.b16 %v3167
        %v3277 = vunpack.c.h.b16 %v3167
        %v3278 = vunpack.c.l.b16 %v3168
        %v3279 = vunpack.c.h.b16 %v3168
        %v3280 = vunpack.c.l.b16 %v3169
        %v3281 = vunpack.c.h.b16 %v3169
        %v3282 = vunpack.c.l.b16 %v3170
        %v3283 = vunpack.c.h.b16 %v3170
        %v3284 = vunpack.c.l.b16 %v3171
        %v3285 = vunpack.c.h.b16 %v3171
        %v3286 = vunpack.c.l.b16 %v3172
        %v3287 = vunpack.c.h.b16 %v3172
        %v3288 = vunpack.c.l.b16 %v3173
        %v3289 = vunpack.c.h.b16 %v3173
        %v3290 = vunpack.c.l.b16 %v3174
        %v3291 = vunpack.c.h.b16 %v3174
        %v3292 = vunpack.c.l.b16 %v3175
        %v3293 = vunpack.c.h.b16 %v3175
        %v3294 = vunpack.c.l.b16 %v3176
        %v3295 = vunpack.c.h.b16 %v3176
        %v3296 = vunpack.c.l.b16 %v3177
        %v3297 = vunpack.c.h.b16 %v3177
        %v3298 = vunpack.c.l.b16 %v3178
        %v3299 = vunpack.c.h.b16 %v3178
        %v3300 = vunpack.c.l.b16 %v3179
        %v3301 = vunpack.c.h.b16 %v3179
        %v3302 = vunpack.c.l.b16 %v3180
        %v3303 = vunpack.c.h.b16 %v3180
        %v3304 = vunpack.c.l.b16 %v3181
        %v3305 = vunpack.c.h.b16 %v3181
        %v3306 = vunpack.c.l.b16 %v3182
        %v3307 = vunpack.c.h.b16 %v3182
        %v3308 = vunpack.c.l.b16 %v3183
        %v3309 = vunpack.c.h.b16 %v3183
        %v3310 = vunpack.c.l.b16 %v3184
        %v3311 = vunpack.c.h.b16 %v3184
        %v3312 = vunpack.c.l.b16 %v3185
        %v3313 = vunpack.c.h.b16 %v3185
        %v3314 = vpack.c.b16 %v3236, %v3234
        %v3315 = vpack.c.b16 %v3237, %v3235
        %v3316 = vpack.c.b16 %v3240, %v3238
        %v3317 = vpack.c.b16 %v3241, %v3239
        %v3318 = vpack.c.b16 %v3244, %v3242
        %v3319 = vpack.c.b16 %v3245, %v3243
        %v3320 = vpack.c.b16 %v3248, %v3246
        %v3321 = vpack.c.b16 %v3249, %v3247
        %v3322 = vpack.c.b16 %v3252, %v3250
        %v3323 = vpack.c.b16 %v3253, %v3251
        %v3324 = vpack.c.b16 %v3256, %v3254
        %v3325 = vpack.c.b16 %v3257, %v3255
        %v3326 = vpack.c.b16 %v3260, %v3258
        %v3327 = vpack.c.b16 %v3261, %v3259
        %v3328 = vpack.c.b16 %v3264, %v3262
        %v3329 = vpack.c.b16 %v3265, %v3263
        %v3330 = vpack.c.b16 %v3268, %v3266
        %v3331 = vpack.c.b16 %v3269, %v3267
        %v3332 = vpack.c.b16 %v3272, %v3270
        %v3333 = vpack.c.b16 %v3273, %v3271
        %v3334 = vpack.c.b16 %v3276, %v3274
        %v3335 = vpack.c.b16 %v3277, %v3275
        %v3336 = vpack.c.b16 %v3280, %v3278
        %v3337 = vpack.c.b16 %v3281, %v3279
        %v3338 = vpack.c.b16 %v3284, %v3282
        %v3339 = vpack.c.b16 %v3285, %v3283
        %v3340 = vpack.c.b16 %v3288, %v3286
        %v3341 = vpack.c.b16 %v3289, %v3287
        %v3342 = vpack.c.b16 %v3292, %v3290
        %v3343 = vpack.c.b16 %v3293, %v3291
        %v3344 = vpack.c.b16 %v3296, %v3294
        %v3345 = vpack.c.b16 %v3297, %v3295
        %v3346 = vpack.c.b16 %v3300, %v3298
        %v3347 = vpack.c.b16 %v3301, %v3299
        %v3348 = vpack.c.b16 %v3304, %v3302
        %v3349 = vpack.c.b16 %v3305, %v3303
        %v3350 = vpack.c.b16 %v3308, %v3306
        %v3351 = vpack.c.b16 %v3309, %v3307
        %v3352 = vpack.c.b16 %v3312, %v3310
        %v3353 = vpack.c.b16 %v3313, %v3311
        %v3395 = vsel %vm593, %v3191, 0
        %3397 = vmatprep.subr.bf16.mxu0 %v3315
        %3398 = vmatpush1.bf16.msra.mxu0 %v3314
        %3399 = vmatprep.subr.bf16.mxu0 %v3317
        %3400 = vmatpush1.bf16.msra.mxu0 %v3316
        %3401 = vmatprep.subr.bf16.mxu0 %v3319
        %3402 = vmatpush1.bf16.msra.mxu0 %v3318
        %3403 = vmatprep.subr.bf16.mxu0 %v3321
        %3404 = vmatpush1.bf16.msra.mxu0 %v3320
        %3405 = vmatprep.subr.bf16.mxu0 %v3323
        %3406 = vmatpush1.bf16.msra.mxu0 %v3322
        %3407 = vmatprep.subr.bf16.mxu0 %v3325
        %3408 = vmatpush1.bf16.msra.mxu0 %v3324
        %3409 = vmatprep.subr.bf16.mxu0 %v3327
        %3410 = vmatpush1.bf16.msra.mxu0 %v3326
        %3411 = vmatprep.subr.bf16.mxu0 %v3329
        %3412 = vmatpush1.bf16.msra.mxu0 %v3328
        %3413 = vmatprep.subr.bf16.mxu0 %v3331
        %3414 = vmatpush1.bf16.msra.mxu0 %v3330
        %3415 = vmatprep.subr.bf16.mxu0 %v3333
        %3416 = vmatpush1.bf16.msra.mxu0 %v3332
        %3417 = vmatprep.subr.bf16.mxu0 %v3335
        %3418 = vmatpush1.bf16.msra.mxu0 %v3334
        %3419 = vmatprep.subr.bf16.mxu0 %v3337
        %3420 = vmatpush1.bf16.msra.mxu0 %v3336
        %3421 = vmatprep.subr.bf16.mxu0 %v3339
        %3422 = vmatpush1.bf16.msra.mxu0 %v3338
        %3423 = vmatprep.subr.bf16.mxu0 %v3341
        %3424 = vmatpush1.bf16.msra.mxu0 %v3340
        %3425 = vmatprep.subr.bf16.mxu0 %v3343
        %3426 = vmatpush1.bf16.msra.mxu0 %v3342
        %3427 = vmatprep.subr.bf16.mxu0 %v3345
        %3428 = vmatpush1.bf16.msra.mxu0 %v3344
        %3429 = vmatprep.mubr.bf16.mxu0 %v3190
        %3430 = vmatmul.mubr.bf16.gmra.mrb[0].mxu0 %v3189
        %v3431 = vpop.f32.mrb[0].mxu0
        %v3432 = vadd.f32 0.0, %v3431
        %v3433 = vpop.f32.mrb[0].mxu0
        %v3434 = vadd.f32 0.0, %v3433
        %v3435 = vpop.f32.mrb[0].mxu0
        %v3436 = vadd.f32 0.0, %v3435
        %v3437 = vpop.f32.mrb[0].mxu0
        %v3438 = vadd.f32 0.0, %v3437
        %3439 = vdwg.mxu0
        %3440 = vmatprep.subr.bf16.mxu0 %v3347
        %3441 = vmatpush1.bf16.msra.mxu0 %v3346
        %3442 = vmatprep.subr.bf16.mxu0 %v3349
        %3443 = vmatpush1.bf16.msra.mxu0 %v3348
        %3444 = vmatprep.subr.bf16.mxu0 %v3351
        %3445 = vmatpush1.bf16.msra.mxu0 %v3350
        %3446 = vmatprep.subr.bf16.mxu0 %v3353
        %3447 = vmatpush1.bf16.msra.mxu0 %v3352
        %3448 = vmatprep.subr.bf16.mxu0 0
        %3449 = vmatpush1.bf16.msra.mxu0 0
        %3450 = vmatprep.subr.bf16.mxu0 0
        %3451 = vmatpush1.bf16.msra.mxu0 0
        %3452 = vmatprep.subr.bf16.mxu0 0
        %3453 = vmatpush1.bf16.msra.mxu0 0
        %3454 = vmatprep.subr.bf16.mxu0 0
        %3455 = vmatpush1.bf16.msra.mxu0 0
        %3456 = vmatprep.subr.bf16.mxu0 0
        %3457 = vmatpush1.bf16.msra.mxu0 0
        %3458 = vmatprep.subr.bf16.mxu0 0
        %3459 = vmatpush1.bf16.msra.mxu0 0
        %3460 = vmatprep.subr.bf16.mxu0 0
        %3461 = vmatpush1.bf16.msra.mxu0 0
        %3462 = vmatprep.subr.bf16.mxu0 0
        %3463 = vmatpush1.bf16.msra.mxu0 0
        %3464 = vmatprep.subr.bf16.mxu0 0
        %3465 = vmatpush1.bf16.msra.mxu0 0
        %3466 = vmatprep.subr.bf16.mxu0 0
        %3467 = vmatpush1.bf16.msra.mxu0 0
        %3468 = vmatprep.subr.bf16.mxu0 0
        %3469 = vmatpush1.bf16.msra.mxu0 0
        %3470 = vmatprep.subr.bf16.mxu0 0
        %3471 = vmatpush1.bf16.msra.mxu0 0
        %3472 = vmatprep.mubr.bf16.mxu0 0
        %3473 = vmatmul.mubr.bf16.gmra.mrb[0].mxu0 %v3395
        %v3474 = vpop.f32.mrb[0].mxu0
        %v3475 = vadd.f32 %v3432, %v3474
        %v3476 = vpop.f32.mrb[0].mxu0
        %v3477 = vadd.f32 %v3434, %v3476
        %v3478 = vpop.f32.mrb[0].mxu0
        %v3479 = vadd.f32 %v3436, %v3478
        %v3480 = vpop.f32.mrb[0].mxu0
        %v3481 = vadd.f32 %v3438, %v3480
        %3482 = vdwg.mxu0
        %v3483 = vadd.f32 %v3131, %v3475
        %v3484 = vadd.f32 %v3132, %v3477
        %v3485 = vadd.f32 %v3133, %v3479
        %v3486 = vadd.f32 %v3134, %v3481
        %v3487 = vld [vmem:[#allocation5] sm:$0x3]
        %v3489 = vlaneseq
        %v3490 = vshrl.u32 %v3489, 7
        %v3491 = vsub.s32 0, %v3490
        %v3492 = vrot.slane %v3487, %v3491
        %v3493 = vlaneseq
        %v3494 = vshrl.u32 %v3493, 7
        %v3495 = vsub.s32 1, %v3494
        %v3496 = vrot.slane %v3487, %v3495
        %v3499 = vadd.f32 %v3483, %v3492
        %v3500 = vadd.f32 %v3484, %v3496
        %v3501 = vadd.f32 %v3485, %v3492
        %v3502 = vadd.f32 %v3486, %v3496
        %v3503 = vmax.f32 %v3499, 0.0
        %v3504 = vmax.f32 %v3500, 0.0
        %v3505 = vmax.f32 %v3501, 0.0
        %v3506 = vmax.f32 %v3502, 0.0
        %3507 = vst [vmem:[%s215] sm:$0xff] %v3503
        %3508 = vst [vmem:[%s215 + $0x8] sm:$0xff] %v3504
        %3509 = vst [vmem:[%s215 + $0x10] sm:$0xff] %v3505
        %3510 = vst [vmem:[%s215 + $0x18] sm:$0xff] %v3506
        %s3511 = sand.u32 %s111, 1
        %s3512 = scalar_lea.sflag [#allocation4], %s3511
        %s3513 = sand.u32 %s111, 1
        %s3514 = smul.addr %s3513, 32
        %s3515 = scalar_lea.vmem [#allocation7], %s3514
        // Predicated region
        $region41: #{tpu_custom_call.1} parent=31 // pred_check
          %p3516 = pneg %p121
        $region42: #{tpu_custom_call.1} parent=31 // pred_check_branch
          %3518 = sbr.rel (%p3516) target = $region44
        $region43: #{tpu_custom_call.1} parent=31 // pred_region
          %s3520 = ssub.s32 512, 512
          %3521 = vsyncadd %s3512, %s3520
          %s3522 = smul.addr %s24, 4
          %s3523 = smul.addr %s23, 8
          %s3524 = sadd.s32 %s3522, %s3523
          %s3525 = smul.addr %s3524, 128
          %s3526 = scalar_lea.hbm %s3, %s3525
          %s3527 = sshll.u32 %s3515, 4
          %s3528 = int_to_ptr.vmem [resolvable:$true] %s3527
          %3533 = dma.vmem_to_hbm [thread:$0]  %s3528, 512, %s3526, %s3512, 256, 256, 16
        $region44: #{tpu_custom_call.1} parent=31 // pred_fallthru
          _
      $region32: #{tpu_custom_call.1} parent=5 // pred_fallthru
        _
      %p3534 = scmp.le.s32.totalorder 2, %s14
      // Predicated region
      $region45: #{tpu_custom_call.1} parent=5 // pred_check
        %p3535 = pneg %p3534
      $region46: #{tpu_custom_call.1} parent=5 // pred_check_branch
        %3537 = sbr.rel (%p3535) target = $region48
      $region47: #{tpu_custom_call.1} parent=5 // pred_region
        %s3538 = ssub.s32 %s14, 2
        // Predicated region
        $region49: #{tpu_custom_call.1} parent=47 // pred_check
          %p3539 = pneg %p127
        $region50: #{tpu_custom_call.1} parent=47 // pred_check_branch
          %3541 = sbr.rel (%p3539) target = $region52
        $region51: #{tpu_custom_call.1} parent=47 // pred_region
          %s3542 = sand.u32 %s112, 1
          %s3543 = scalar_lea.sflag [#allocation4], %s3542
          %s3544 = sand.u32 %s112, 1
          %s3545 = smul.addr %s3544, 32
          %s3546 = scalar_lea.vmem [#allocation7], %s3545
          %3547 = dma.done %s3543, 512
        $region52: #{tpu_custom_call.1} parent=47 // pred_fallthru
          _
      $region48: #{tpu_custom_call.1} parent=5 // pred_fallthru
        _
    $region6: #{tpu_custom_call.1} parent=1 // loop_footer
      %s18 = sadd.s32 1, %s14
    $region7: #{tpu_custom_call.1} parent=1 // loop_footer_branch
      %13 = sbr.rel target = $region3
    $region8: #{tpu_custom_call.1} parent=1 // loop_exit
      _
    %3548 = vsyncpa [#allocation3], 1
    %s3549 = scalar_lea.sflag [#allocation3], 1
    %3550 = vsyncpa %s3549, 1
    %3551 = vsyncpa [#allocation6], 1
    %3552 = vsyncpa [#allocation4], 1
    %s3553 = scalar_lea.sflag [#allocation4], 1
    %3554 = vsyncpa %s3553, 1

</llo_original>
